<compile_context>
chip_gen: v5e
topology: v5e:2x2
jax: 0.10.0
libtpu: 0.0.40
codegen_flags: <defaults>
</compile_context>

<pallas_src>
import functools
import math

import jax
import jax.numpy as jnp
from jax.experimental import pallas as pl
from jax.experimental.pallas import tpu as pltpu


def _ggnn_kernel(h0_hbm_ref, adj_ref, wmsg_ref, gib_ref, wh_ref, bh_ref,
                 out_ref, hcur_ref, hbf_ref, msgs_ref, dma_sem,
                 *, hidden_pad, n_etypes, tile_m, adj_resident):
    """Fused GGNN stack. grid = (layer, step, dst_tile), all 'arbitrary'.

    Scratch:
      hcur_ref : (N_pad, Hp)       f32  node hidden state, persists across the grid
      hbf_ref  : (N_pad, Hp)       bf16 shadow of hcur (MXU operand, no per-step recast)
      msgs_ref : (N_pad, E*3*Hp)   bf16 per-step messages  h @ [W_0@Wi | ... | W_{E-1}@Wi]
      dma_sem  : ()                DMA semaphore for the one-shot h0 copy-in
    """
    Hp = hidden_pad
    G = 3 * Hp
    l = pl.program_id(0)
    s = pl.program_id(1)
    t = pl.program_id(2)

    # One-shot init of the resident node state and its bf16 shadow (h0 lives in HBM).
    @pl.when(jnp.logical_and(jnp.logical_and(l == 0, s == 0), t == 0))
    def _init():
        cp = pltpu.make_async_copy(h0_hbm_ref, hcur_ref, dma_sem)
        cp.start()
        cp.wait()
        hbf_ref[...] = hcur_ref[...].astype(jnp.bfloat16)

    # Once per (layer, step): all-node message+Wi projection, one wide MXU matmul.
    @pl.when(t == 0)
    def _messages():
        msgs_ref[...] = jnp.dot(
            hbf_ref[...], wmsg_ref[0],
            preferred_element_type=jnp.float32).astype(jnp.bfloat16)

    start = pl.multiple_of(t * tile_m, tile_m)

    # gi = sum_e A_e[tile] @ (h @ W_e @ Wi) + [sum_e deg_e * (b_e @ Wi) + bi]  (hoisted)
    gi = gib_ref[0]
    for e in range(n_etypes):
        if adj_resident:
            a_e = adj_ref[e, pl.ds(start, tile_m), :]       # resident full-graph block
        else:
            a_e = adj_ref[e]                                # streamed (int8) dst tile
        gi = gi + jnp.dot(a_e.astype(jnp.bfloat16),
                          msgs_ref[:, e * G:(e + 1) * G],
                          preferred_element_type=jnp.float32)

    # GRUCell(agg, h_tile): gates packed [r | z | n], each gate lane-padded to Hp
    # (padded lanes stay exactly 0 by construction of the padded weights/biases).
    h_tile = hcur_ref[pl.ds(start, tile_m), :]
    gh = jnp.dot(hbf_ref[pl.ds(start, tile_m), :], wh_ref[0],
                 preferred_element_type=jnp.float32) + bh_ref[0]
    r = jax.nn.sigmoid(gi[:, 0:Hp] + gh[:, 0:Hp])
    z = jax.nn.sigmoid(gi[:, Hp:2 * Hp] + gh[:, Hp:2 * Hp])
    n = jnp.tanh(gi[:, 2 * Hp:3 * Hp] + r * gh[:, 2 * Hp:3 * Hp])
    h_new = (1.0 - z) * n + z * h_tile

    # In-place update is safe: this step's msgs were snapshotted at t == 0 and other
    # tiles only read their own rows of hcur/hbf.
    hcur_ref[pl.ds(start, tile_m), :] = h_new
    hbf_ref[pl.ds(start, tile_m), :] = h_new.astype(jnp.bfloat16)

    # HBM writeback only on the final (layer, step) pass. Combined with the out index
    # map (revisits block 0 on non-final passes) each tile is written back exactly once.
    @pl.when(jnp.logical_and(l == pl.num_programs(0) - 1,
                             s == pl.num_programs(1) - 1))
    def _final():
        out_ref[...] = h_new


def init_ggnn_params(key, hidden_size, num_layers, num_etypes):
    """Deterministic params in torch-like packed layout (x @ W form).

    Per layer:
      we (E, H, H)  per-etype message Linear (msg_e = h @ we[e] + be[e])
      be (E, H)
      wi (H, 3H)    GRU input-to-hidden  [W_ir | W_iz | W_in]
      wh (H, 3H)    GRU hidden-to-hidden [W_hr | W_hz | W_hn]
      bi, bh (1, 3H)
    """
    H, L, E = hidden_size, num_layers, num_etypes
    bound = 1.0 / math.sqrt(H)
    ks = jax.random.split(key, 6)
    u = lambda k, shape: jax.random.uniform(k, shape, jnp.float32, -bound, bound)
    we = u(ks[0], (L, E, H, H))
    be = u(ks[1], (L, E, H))
    wi = u(ks[2], (L, H, 3 * H))
    wh = u(ks[3], (L, H, 3 * H))
    bi = u(ks[4], (L, 1, 3 * H))
    bh = u(ks[5], (L, 1, 3 * H))
    return we, be, wi, wh, bi, bh


def _pad_gates(x, width, padded):
    """Pad each gate block of [r|z|n] (packed on the last axis) from width to padded."""
    out = jnp.zeros(x.shape[:-1] + (3 * padded,), x.dtype)
    for g in range(3):
        out = out.at[..., g * padded:g * padded + width].set(
            x[..., g * width:(g + 1) * width])
    return out


def _prepare_inputs(node_features, adj, params, *, hidden_size, num_etypes, tile_m=256):
    """Lane-pad to 128, fold Wi into the message weights, hoist biases, pick tiling."""
    we, be, wi, wh, bi, bh = params
    L = we.shape[0]
    E = num_etypes
    H = hidden_size
    Hp = ((H + 127) // 128) * 128          # lane-pad the feature axis to a multiple of 128
    G = 3 * Hp
    N, F = node_features.shape
    assert F <= H, "GatedGraphConv requires input_size <= hidden_size"

    # dst tile rows: multiple of 16 (bf16 sublane packing), capped at tile_m.
    if N >= tile_m:
        tm = tile_m
    else:
        tm = ((N + 15) // 16) * 16
    n_tiles = (N + tm - 1) // tm
    n_pad = n_tiles * tm

    f32 = jnp.float32
    # ---- lane-pad parameters; zero rows/cols keep padded lanes exactly 0 forever ----
    we_p = jnp.zeros((L, E, Hp, Hp), f32).at[:, :, :H, :H].set(we)
    be_p = jnp.zeros((L, E, Hp), f32).at[:, :, :H].set(be)
    wi_g = _pad_gates(wi, H, Hp)                                   # (L, H, G)
    wh_g = _pad_gates(wh, H, Hp)
    wi_p = jnp.zeros((L, Hp, G), f32).at[:, :H, :].set(wi_g)
    wh_p = jnp.zeros((L, Hp, G), f32).at[:, :H, :].set(wh_g)
    bi_p = _pad_gates(bi, H, Hp)                                   # (L, 1, G)
    bh_p = _pad_gates(bh, H, Hp)

    # ---- fold the GRU input projection into the message weights: W'_e = W_e @ Wi ----
    wmsg = jnp.einsum('lehk,lkg->lehg', we_p, wi_p)                # (L, E, Hp, G)
    wmsg_cat = jnp.transpose(wmsg, (0, 2, 1, 3)).reshape(L, Hp, E * G).astype(jnp.bfloat16)

    # ---- node state / adjacency padding ----
    h0 = jnp.zeros((n_pad, Hp), f32).at[:N, :F].set(node_features.astype(f32))
    adj_f32 = jnp.zeros((E, n_pad, n_pad), f32).at[:, :N, :N].set(adj.astype(f32))

    # Hoisted, step-invariant bias of gi: sum_e deg_e(dst) * (b_e @ Wi) + bi
    deg = adj_f32.sum(axis=2)                                      # (E, n_pad)
    be_proj = jnp.einsum('leh,lhg->leg', be_p, wi_p)               # (L, E, G)
    gib = jnp.einsum('en,leg->lng', deg, be_proj) + bi_p           # (L, n_pad, G) f32

    # Adjacency: resident bf16 full block when small enough, else streamed int8 tiles.
    adj_resident = (E * n_pad * n_pad * 2) <= 16 * 1024 * 1024
    adj_op = adj_f32.astype(jnp.bfloat16) if adj_resident else adj_f32.astype(jnp.int8)

    wh_bf = wh_p.astype(jnp.bfloat16)

    # ---- VMEM footprint -> scoped limit (v7x has only 64 MiB/TC) ----
    if adj_resident:
        adj_bytes = 2 * E * n_pad * n_pad * 2
    else:
        adj_bytes = 2 * E * tm * n_pad * 1
    need = (n_pad * Hp * 4 + n_pad * Hp * 2 + n_pad * E * G * 2      # hcur + hbf + msgs
            + adj_bytes
            + 2 * (Hp * E * G * 2 + Hp * G * 2 + G * 4 + tm * G * 4)  # layer weights (2 bufs)
            + 2 * tm * Hp * 4                                         # out block (2 bufs)
            + n_pad * Hp * 4)                                         # slack for h0 staging
    vmem_limit = int(min(max(2 * need, 32 * 1024 * 1024), 64 * 1024 * 1024))
    vmem_limit = max(vmem_limit, int(1.3 * need))
    vmem_limit = min(vmem_limit, 100 * 1024 * 1024)

    operands = (h0, adj_op, wmsg_cat, gib, wh_bf, bh_p)
    meta = dict(hidden_pad=Hp, tile_m=tm, n_tiles=n_tiles, n_pad=n_pad,
                adj_resident=adj_resident, vmem_limit_bytes=vmem_limit)
    return operands, meta


def ggnn_model(node_features, adj, params, *, hidden_size, num_steps, num_etypes,
               tile_m=256):
    """Full GGNNModel forward as one fused pallas_call."""
    operands, meta = _prepare_inputs(
        node_features, adj, params,
        hidden_size=hidden_size, num_etypes=num_etypes, tile_m=tile_m)
    h0, adj_op, wmsg_cat, gib, wh_bf, bh_p = operands
    L = wmsg_cat.shape[0]
    E = num_etypes
    Hp = meta["hidden_pad"]
    G = 3 * Hp
    tm = meta["tile_m"]
    n_tiles = meta["n_tiles"]
    n_pad = meta["n_pad"]
    adj_resident = meta["adj_resident"]
    N = node_features.shape[0]

    if adj_resident:
        # Constant index -> fetched once, stays resident (no per-step re-DMA).
        adj_spec = pl.BlockSpec((E, n_pad, n_pad), lambda l, s, t: (0, 0, 0))
    else:
        # Streamed int8 dst tile (half the HBM traffic of bf16), upcast in-kernel.
        adj_spec = pl.BlockSpec((E, tm, n_pad), lambda l, s, t: (0, t, 0))

    last_l, last_s = L - 1, num_steps - 1

    def out_map(l, s, t):
        # Revisit block 0 on non-final passes so each output tile is flushed to HBM
        # exactly once, with the data stored during the final (layer, step) pass.
        final = jnp.logical_and(l == last_l, s == last_s)
        return (jnp.where(final, t, 0), 0)

    kernel = functools.partial(_ggnn_kernel, hidden_pad=Hp, n_etypes=E,
                               tile_m=tm, adj_resident=adj_resident)

    out = pl.pallas_call(
        kernel,
        out_shape=jax.ShapeDtypeStruct((n_pad, Hp), jnp.float32),
        grid_spec=pltpu.PrefetchScalarGridSpec(
            num_scalar_prefetch=0,
            grid=(L, num_steps, n_tiles),
            in_specs=[
                pl.BlockSpec(memory_space=pl.ANY),                        # h0 (one-shot DMA)
                adj_spec,                                                 # adjacency
                pl.BlockSpec((1, Hp, E * G), lambda l, s, t: (l, 0, 0)),  # W_e @ Wi packed
                pl.BlockSpec((1, tm, G), lambda l, s, t: (l, t, 0)),      # hoisted gi bias
                pl.BlockSpec((1, Hp, G), lambda l, s, t: (l, 0, 0)),      # GRU Wh
                pl.BlockSpec((1, 1, G), lambda l, s, t: (l, 0, 0)),       # GRU bh
            ],
            out_specs=pl.BlockSpec((tm, Hp), out_map),
            scratch_shapes=[
                pltpu.VMEM((n_pad, Hp), jnp.float32),      # node state h (f32)
                pltpu.VMEM((n_pad, Hp), jnp.bfloat16),     # bf16 shadow of h
                pltpu.VMEM((n_pad, E * G), jnp.bfloat16),  # per-step messages (Wi folded)
                pltpu.SemaphoreType.DMA(()),               # one-shot h0 copy-in
            ],
        ),
        compiler_params=pltpu.CompilerParams(
            # h/hbf/msgs scratch carry dependencies across every axis -> all 'arbitrary'.
            dimension_semantics=("arbitrary", "arbitrary", "arbitrary"),
            vmem_limit_bytes=meta["vmem_limit_bytes"],
        ),
    )(*operands)
    return out[:N, :hidden_size]


def _ggnn_reference(operands, num_steps):
    """Pure-JAX reference at identical (folded-Wi, bf16-in / f32-accumulate) precision."""
    h0, adj_op, wmsg_cat, gib, wh_bf, bh = operands
    L = wmsg_cat.shape[0]
    Hp = h0.shape[1]
    G = 3 * Hp
    E = wmsg_cat.shape[2] // G
    adj_bf = adj_op.astype(jnp.bfloat16)
    h = h0
    for l in range(L):
        for _ in range(num_steps):
            hbf = h.astype(jnp.bfloat16)
            msgs = jnp.dot(hbf, wmsg_cat[l],
                           preferred_element_type=jnp.float32).astype(jnp.bfloat16)
            gi = gib[l]
            for e in range(E):
                gi = gi + jnp.dot(adj_bf[e], msgs[:, e * G:(e + 1) * G],
                                  preferred_element_type=jnp.float32)
            gh = jnp.dot(hbf, wh_bf[l], preferred_element_type=jnp.float32) + bh[l]
            r = jax.nn.sigmoid(gi[:, :Hp] + gh[:, :Hp])
            z = jax.nn.sigmoid(gi[:, Hp:2 * Hp] + gh[:, Hp:2 * Hp])
            n = jnp.tanh(gi[:, 2 * Hp:] + r * gh[:, 2 * Hp:])
            h = (1.0 - z) * n + z * h
    return h


if __name__ == "__main__":
    # Small shapes consistent with the module: N nodes, input_size-dim features,
    # num_etypes edge types, num_layers GatedGraphConv layers of num_steps each.
    N = 16
    input_size = 16
    hidden_size = 32
    num_layers = 2
    num_steps = 3
    num_etypes = 2

    key = jax.random.PRNGKey(0)
    k_feat, k_adj, k_param = jax.random.split(key, 3)

    node_features = jax.random.normal(k_feat, (N, input_size), jnp.float32)
    # dense per-etype adjacency: A[e, dst, src] in {0, 1}
    adj = (jax.random.uniform(k_adj, (num_etypes, N, N)) < 0.3).astype(jnp.float32)

    params = init_ggnn_params(k_param, hidden_size, num_layers, num_etypes)

    out = ggnn_model(node_features, adj, params,
                     hidden_size=hidden_size,
                     num_steps=num_steps,
                     num_etypes=num_etypes)
    out = jax.block_until_ready(out)
    assert out.shape == (N, hidden_size) and out.dtype == jnp.float32
    assert bool(jnp.isfinite(out).all())

    # Structural correctness check vs. a pure-JAX reference at identical precision.
    operands, _meta = _prepare_inputs(node_features, adj, params,
                                      hidden_size=hidden_size,
                                      num_etypes=num_etypes)
    ref = _ggnn_reference(operands, num_steps)[:N, :hidden_size]
    err = float(jnp.max(jnp.abs(out - ref)))
    assert err < 1e-2, f"kernel/reference mismatch: {err}"

    print("KERNEL_OK")
</pallas_src>

<mosaic_0001>
module attributes {stable_mosaic.version = 11 : i64} {
  func.func @_ggnn_kernel(%arg0: i32, %arg1: i32, %arg2: i32, %arg3: memref<16x128xf32, #tpu.memory_space<any>>, %arg4: memref<2x16x16xbf16, #tpu.memory_space<vmem>>, %arg5: memref<1x128x768xbf16, #tpu.memory_space<vmem>>, %arg6: memref<1x16x384xf32, #tpu.memory_space<vmem>>, %arg7: memref<1x128x384xbf16, #tpu.memory_space<vmem>>, %arg8: memref<1x1x384xf32, #tpu.memory_space<vmem>>, %arg9: memref<16x128xf32, #tpu.memory_space<vmem>>, %arg10: memref<16x128xf32, #tpu.memory_space<vmem>>, %arg11: memref<16x128xbf16, #tpu.memory_space<vmem>>, %arg12: memref<16x768xbf16, #tpu.memory_space<vmem>>, %arg13: memref<!tpu.dma_semaphore, #tpu.memory_space<semaphore_mem>>) attributes {dimension_semantics = [#tpu.dimension_semantics<arbitrary>, #tpu.dimension_semantics<arbitrary>, #tpu.dimension_semantics<arbitrary>], iteration_bounds = array<i64: 2, 3, 1>, scalar_prefetch = 0 : i64, scratch_operands = 4 : i64, tpu.core_type = #tpu.core_type<tc>, window_params = [{}, {pipeline_mode = #tpu.pipeline_mode<synchronous>, transform_indices = @transform_1, window_bounds = array<i64: 2, 16, 16>}, {transform_indices = @transform_2, window_bounds = array<i64: 1, 128, 768>}, {transform_indices = @transform_3, window_bounds = array<i64: 1, 16, 384>}, {transform_indices = @transform_4, window_bounds = array<i64: 1, 128, 384>}, {transform_indices = @transform_5, window_bounds = array<i64: 1, 1, 384>}, {transform_indices = @transform_6, window_bounds = array<i64: 16, 128>}]} {
    %c0_i32 = arith.constant 0 : i32
    %0 = arith.cmpi eq, %arg0, %c0_i32 : i32
    %c0_i32_0 = arith.constant 0 : i32
    %1 = arith.cmpi eq, %arg1, %c0_i32_0 : i32
    %2 = arith.andi %0, %1 : i1
    %c0_i32_1 = arith.constant 0 : i32
    %3 = arith.cmpi eq, %arg2, %c0_i32_1 : i32
    %4 = arith.andi %2, %3 : i1
    %5 = arith.extui %4 : i1 to i32
    %c0_i32_2 = arith.constant 0 : i32
    %6 = arith.cmpi ne, %5, %c0_i32_2 : i32
    scf.if %6 {
      tpu.enqueue_dma source(%arg3 : memref<16x128xf32, #tpu.memory_space<any>>) target(%arg10 : memref<16x128xf32, #tpu.memory_space<vmem>>) target_semaphore(%arg13 : memref<!tpu.dma_semaphore, #tpu.memory_space<semaphore_mem>>)
      tpu.wait_dma2 semaphore(%arg13 : memref<!tpu.dma_semaphore, #tpu.memory_space<semaphore_mem>>) src(%arg3 : memref<16x128xf32, #tpu.memory_space<any>>) dst(%arg10 : memref<16x128xf32, #tpu.memory_space<vmem>>)
      %c0_29 = arith.constant 0 : index
      %c0_30 = arith.constant 0 : index
      %73 = vector.load %arg10[%c0_29, %c0_30] : memref<16x128xf32, #tpu.memory_space<vmem>>, vector<16x128xf32>
      %74 = arith.truncf %73 : vector<16x128xf32> to vector<16x128xbf16>
      %c0_31 = arith.constant 0 : index
      %c0_32 = arith.constant 0 : index
      %75 = vector.load %arg11[%c0_31, %c0_32] : memref<16x128xbf16, #tpu.memory_space<vmem>>, vector<16x128xbf16>
      tpu.vector_store %arg11[%c0_31, %c0_32], %74 {strides = array<i32>} : memref<16x128xbf16, #tpu.memory_space<vmem>>, vector<16x128xbf16>,
    } else {
    }
    %c0_i32_3 = arith.constant 0 : i32
    %7 = arith.cmpi eq, %arg2, %c0_i32_3 : i32
    %8 = arith.extui %7 : i1 to i32
    %c0_i32_4 = arith.constant 0 : i32
    %9 = arith.cmpi ne, %8, %c0_i32_4 : i32
    scf.if %9 {
      %c0_29 = arith.constant 0 : index
      %c0_30 = arith.constant 0 : index
      %73 = vector.load %arg11[%c0_29, %c0_30] : memref<16x128xbf16, #tpu.memory_space<vmem>>, vector<16x128xbf16>
      %c0_31 = arith.constant 0 : index
      %c0_32 = arith.constant 0 : index
      %c0_33 = arith.constant 0 : index
      %74 = vector.load %arg5[%c0_31, %c0_32, %c0_33] : memref<1x128x768xbf16, #tpu.memory_space<vmem>>, vector<1x128x768xbf16>
      %75 = vector.shape_cast %74 : vector<1x128x768xbf16> to vector<128x768xbf16>
      %cst_34 = arith.constant dense<0.000000e+00> : vector<16x768xf32>
      %76 = tpu.matmul %73, %75, %cst_34 {dimension_numbers = #tpu.dot_dimension_numbers<[1], [0], [0], [1], [0, 0, 1, 1], [], []>} : vector<16x128xbf16>, vector<128x768xbf16>, vector<16x768xf32> -> vector<16x768xf32>
      %77 = arith.truncf %76 : vector<16x768xf32> to vector<16x768xbf16>
      %c0_35 = arith.constant 0 : index
      %c0_36 = arith.constant 0 : index
      %78 = vector.load %arg12[%c0_35, %c0_36] : memref<16x768xbf16, #tpu.memory_space<vmem>>, vector<16x768xbf16>
      tpu.vector_store %arg12[%c0_35, %c0_36], %77 {strides = array<i32>} : memref<16x768xbf16, #tpu.memory_space<vmem>>, vector<16x768xbf16>,
    } else {
    }
    %c16_i32 = arith.constant 16 : i32
    %10 = arith.muli %arg2, %c16_i32 : i32
    %11 = tpu.assume_multiple %10, 16 : i32
    %c0 = arith.constant 0 : index
    %c0_5 = arith.constant 0 : index
    %c0_6 = arith.constant 0 : index
    %12 = vector.load %arg6[%c0, %c0_5, %c0_6] : memref<1x16x384xf32, #tpu.memory_space<vmem>>, vector<1x16x384xf32>
    %13 = vector.shape_cast %12 : vector<1x16x384xf32> to vector<16x384xf32>
    %c0_7 = arith.constant 0 : index
    %14 = arith.index_cast %11 : i32 to index
    %c0_8 = arith.constant 0 : index
    %15 = vector.load %arg4[%c0_7, %14, %c0_8] : memref<2x16x16xbf16, #tpu.memory_space<vmem>>, vector<1x16x16xbf16>
    %16 = vector.shape_cast %15 : vector<1x16x16xbf16> to vector<16x16xbf16>
    %c0_9 = arith.constant 0 : index
    %c0_10 = arith.constant 0 : index
    %17 = vector.load %arg12[%c0_9, %c0_10] : memref<16x768xbf16, #tpu.memory_space<vmem>>, vector<16x384xbf16>
    %cst = arith.constant dense<0.000000e+00> : vector<16x384xf32>
    %18 = tpu.matmul %16, %17, %cst {dimension_numbers = #tpu.dot_dimension_numbers<[1], [0], [0], [1], [0, 0, 1, 1], [], []>} : vector<16x16xbf16>, vector<16x384xbf16>, vector<16x384xf32> -> vector<16x384xf32>
    %19 = arith.addf %13, %18 : vector<16x384xf32>
    %c1 = arith.constant 1 : index
    %20 = arith.index_cast %11 : i32 to index
    %c0_11 = arith.constant 0 : index
    %21 = vector.load %arg4[%c1, %20, %c0_11] : memref<2x16x16xbf16, #tpu.memory_space<vmem>>, vector<1x16x16xbf16>
    %22 = vector.shape_cast %21 : vector<1x16x16xbf16> to vector<16x16xbf16>
    %c0_12 = arith.constant 0 : index
    %c384 = arith.constant 384 : index
    %23 = vector.load %arg12[%c0_12, %c384] : memref<16x768xbf16, #tpu.memory_space<vmem>>, vector<16x384xbf16>
    %cst_13 = arith.constant dense<0.000000e+00> : vector<16x384xf32>
    %24 = tpu.matmul %22, %23, %cst_13 {dimension_numbers = #tpu.dot_dimension_numbers<[1], [0], [0], [1], [0, 0, 1, 1], [], []>} : vector<16x16xbf16>, vector<16x384xbf16>, vector<16x384xf32> -> vector<16x384xf32>
    %25 = arith.addf %19, %24 : vector<16x384xf32>
    %26 = arith.index_cast %11 : i32 to index
    %c0_14 = arith.constant 0 : index
    %27 = vector.load %arg10[%26, %c0_14] : memref<16x128xf32, #tpu.memory_space<vmem>>, vector<16x128xf32>
    %28 = arith.index_cast %11 : i32 to index
    %c0_15 = arith.constant 0 : index
    %29 = vector.load %arg11[%28, %c0_15] : memref<16x128xbf16, #tpu.memory_space<vmem>>, vector<16x128xbf16>
    %c0_16 = arith.constant 0 : index
    %c0_17 = arith.constant 0 : index
    %c0_18 = arith.constant 0 : index
    %30 = vector.load %arg7[%c0_16, %c0_17, %c0_18] : memref<1x128x384xbf16, #tpu.memory_space<vmem>>, vector<1x128x384xbf16>
    %31 = vector.shape_cast %30 : vector<1x128x384xbf16> to vector<128x384xbf16>
    %cst_19 = arith.constant dense<0.000000e+00> : vector<16x384xf32>
    %32 = tpu.matmul %29, %31, %cst_19 {dimension_numbers = #tpu.dot_dimension_numbers<[1], [0], [0], [1], [0, 0, 1, 1], [], []>} : vector<16x128xbf16>, vector<128x384xbf16>, vector<16x384xf32> -> vector<16x384xf32>
    %c0_20 = arith.constant 0 : index
    %c0_21 = arith.constant 0 : index
    %c0_22 = arith.constant 0 : index
    %33 = vector.load %arg8[%c0_20, %c0_21, %c0_22] : memref<1x1x384xf32, #tpu.memory_space<vmem>>, vector<1x1x384xf32>
    %34 = vector.shape_cast %33 : vector<1x1x384xf32> to vector<1x384xf32>
    %35 = vector.broadcast %34 : vector<1x384xf32> to vector<16x384xf32>
    %36 = arith.addf %32, %35 : vector<16x384xf32>
    %37 = vector.extract_strided_slice %25 {offsets = [0, 0], sizes = [16, 128], strides = [1, 1]} : vector<16x384xf32> to vector<16x128xf32>
    %38 = vector.extract_strided_slice %36 {offsets = [0, 0], sizes = [16, 128], strides = [1, 1]} : vector<16x384xf32> to vector<16x128xf32>
    %39 = arith.addf %37, %38 : vector<16x128xf32>
    %40 = arith.negf %39 : vector<16x128xf32>
    %41 = math.exp %40 : vector<16x128xf32>
    %cst_23 = arith.constant 1.000000e+00 : f32
    %42 = vector.broadcast %cst_23 : f32 to vector<16x128xf32>
    %43 = arith.addf %42, %41 : vector<16x128xf32>
    %44 = arith.divf %42, %43 : vector<16x128xf32>
    %45 = vector.extract_strided_slice %25 {offsets = [0, 128], sizes = [16, 128], strides = [1, 1]} : vector<16x384xf32> to vector<16x128xf32>
    %46 = vector.extract_strided_slice %36 {offsets = [0, 128], sizes = [16, 128], strides = [1, 1]} : vector<16x384xf32> to vector<16x128xf32>
    %47 = arith.addf %45, %46 : vector<16x128xf32>
    %48 = arith.negf %47 : vector<16x128xf32>
    %49 = math.exp %48 : vector<16x128xf32>
    %cst_24 = arith.constant 1.000000e+00 : f32
    %50 = vector.broadcast %cst_24 : f32 to vector<16x128xf32>
    %51 = arith.addf %50, %49 : vector<16x128xf32>
    %52 = arith.divf %50, %51 : vector<16x128xf32>
    %53 = vector.extract_strided_slice %25 {offsets = [0, 256], sizes = [16, 128], strides = [1, 1]} : vector<16x384xf32> to vector<16x128xf32>
    %54 = vector.extract_strided_slice %36 {offsets = [0, 256], sizes = [16, 128], strides = [1, 1]} : vector<16x384xf32> to vector<16x128xf32>
    %55 = arith.mulf %44, %54 : vector<16x128xf32>
    %56 = arith.addf %53, %55 : vector<16x128xf32>
    %57 = math.tanh %56 : vector<16x128xf32>
    %cst_25 = arith.constant 1.000000e+00 : f32
    %58 = vector.broadcast %cst_25 : f32 to vector<16x128xf32>
    %59 = arith.subf %58, %52 : vector<16x128xf32>
    %60 = arith.mulf %59, %57 : vector<16x128xf32>
    %61 = arith.mulf %52, %27 : vector<16x128xf32>
    %62 = arith.addf %60, %61 : vector<16x128xf32>
    %63 = arith.index_cast %11 : i32 to index
    %c0_26 = arith.constant 0 : index
    %64 = vector.load %arg10[%63, %c0_26] : memref<16x128xf32, #tpu.memory_space<vmem>>, vector<16x128xf32>
    tpu.vector_store %arg10[%63, %c0_26], %62 {strides = array<i32>} : memref<16x128xf32, #tpu.memory_space<vmem>>, vector<16x128xf32>,
    %65 = arith.truncf %62 : vector<16x128xf32> to vector<16x128xbf16>
    %66 = arith.index_cast %11 : i32 to index
    %c0_27 = arith.constant 0 : index
    %67 = vector.load %arg11[%66, %c0_27] : memref<16x128xbf16, #tpu.memory_space<vmem>>, vector<16x128xbf16>
    tpu.vector_store %arg11[%66, %c0_27], %65 {strides = array<i32>} : memref<16x128xbf16, #tpu.memory_space<vmem>>, vector<16x128xbf16>,
    %c1_i32 = arith.constant 1 : i32
    %68 = arith.cmpi eq, %arg0, %c1_i32 : i32
    %c2_i32 = arith.constant 2 : i32
    %69 = arith.cmpi eq, %arg1, %c2_i32 : i32
    %70 = arith.andi %68, %69 : i1
    %71 = arith.extui %70 : i1 to i32
    %c0_i32_28 = arith.constant 0 : i32
    %72 = arith.cmpi ne, %71, %c0_i32_28 : i32
    scf.if %72 {
      %c0_29 = arith.constant 0 : index
      %c0_30 = arith.constant 0 : index
      %73 = vector.load %arg9[%c0_29, %c0_30] : memref<16x128xf32, #tpu.memory_space<vmem>>, vector<16x128xf32>
      tpu.vector_store %arg9[%c0_29, %c0_30], %62 {strides = array<i32>} : memref<16x128xf32, #tpu.memory_space<vmem>>, vector<16x128xf32>,
    } else {
    }
    return
  }
  func.func @transform_1(%arg0: i32, %arg1: i32, %arg2: i32) -> (i32, i32, i32) {
    %c0_i32 = arith.constant 0 : i32
    %c0_i32_0 = arith.constant 0 : i32
    %c0_i32_1 = arith.constant 0 : i32
    %c0_i32_2 = arith.constant 0 : i32
    return %c0_i32, %c0_i32_0, %c0_i32_1 : i32, i32, i32
  }
  func.func @transform_2(%arg0: i32, %arg1: i32, %arg2: i32) -> (i32, i32, i32) {
    %c0_i32 = arith.constant 0 : i32
    %c0_i32_0 = arith.constant 0 : i32
    %c0_i32_1 = arith.constant 0 : i32
    return %arg0, %c0_i32, %c0_i32_0 : i32, i32, i32
  }
  func.func @transform_3(%arg0: i32, %arg1: i32, %arg2: i32) -> (i32, i32, i32) {
    %c0_i32 = arith.constant 0 : i32
    %c0_i32_0 = arith.constant 0 : i32
    return %arg0, %arg2, %c0_i32 : i32, i32, i32
  }
  func.func @transform_4(%arg0: i32, %arg1: i32, %arg2: i32) -> (i32, i32, i32) {
    %c0_i32 = arith.constant 0 : i32
    %c0_i32_0 = arith.constant 0 : i32
    %c0_i32_1 = arith.constant 0 : i32
    return %arg0, %c0_i32, %c0_i32_0 : i32, i32, i32
  }
  func.func @transform_5(%arg0: i32, %arg1: i32, %arg2: i32) -> (i32, i32, i32) {
    %c0_i32 = arith.constant 0 : i32
    %c0_i32_0 = arith.constant 0 : i32
    %c0_i32_1 = arith.constant 0 : i32
    return %arg0, %c0_i32, %c0_i32_0 : i32, i32, i32
  }
  func.func @transform_6(%arg0: i32, %arg1: i32, %arg2: i32) -> (i32, i32) {
    %c1_i32 = arith.constant 1 : i32
    %0 = arith.cmpi eq, %arg0, %c1_i32 : i32
    %c2_i32 = arith.constant 2 : i32
    %1 = arith.cmpi eq, %arg1, %c2_i32 : i32
    %2 = arith.andi %0, %1 : i1
    %c0_i32 = arith.constant 0 : i32
    %3 = arith.select %2, %arg2, %c0_i32 : i32
    %c0_i32_0 = arith.constant 0 : i32
    %c0_i32_1 = arith.constant 0 : i32
    return %3, %c0_i32_0 : i32, i32
  }
}

</mosaic_0001>

<llo_original>
// kernel: tpu_custom_call.1
$region0: #{tpu_custom_call.1}
  #allocation0 [shape = 'u32[]', space=smem, size = 0x4, offset = 0x4, fixed_abs, tag = 'smem constant byte address 0x4 - core index']
  #allocation1 [shape = 'u32[72,128]{1,0:T(1,128)}', space=vmem, size = 0x9000, scoped, tag = 'internal scratch']
  #allocation2 [shape = 'f32[16,128]{1,0:T(8,128)}', space=vmem, size = 0x2000, scoped, tag = 'scratch operand']
  #allocation3 [shape = 'bf16[16,128]{1,0:T(8,128)(2,1)}', space=vmem, size = 0x1000, scoped, tag = 'scratch operand']
  #allocation4 [shape = 'bf16[16,768]{1,0:T(8,128)(2,1)}', space=vmem, size = 0x6000, scoped, tag = 'scratch operand']
  #allocation5 [shape = 's32[1]{0}', space=sflag, size = 0x4, scoped, tag = 'scratch operand']
  #allocation16 [shape = 's32[]', space=sflag, size = 0x4, offset = 0, fixed_abs, tag = 'sflag constant byte address 0x0 - dummy sync flag']
  #allocation17 [shape = 's32[]', space=sflag, size = 0x4, offset = 0, fixed_abs, tag = 'sflag constant byte address 0x0 - dummy sync flag']
  #allocation18 [shape = 'u32[]', space=smem, size = 0x4, offset = 0x44, fixed_abs, tag = 'smem constant byte address 0x44 - assertion arg 0']
  #allocation19 [shape = 'u32[]', space=smem, size = 0x4, offset = 0x48, fixed_abs, tag = 'smem constant byte address 0x48 - assertion arg 1']
  %s0 = inlined_call_operand.hbm [shape: f32[16,128], index: 0, kind: input, shape index: {}]
  %s1 = inlined_call_operand.hbm [shape: bf16[2,16,16], index: 1, kind: input, shape index: {}]
  %s2 = inlined_call_operand.hbm [shape: bf16[2,128,768], index: 2, kind: input, shape index: {}]
  %s3 = inlined_call_operand.hbm [shape: f32[2,16,384], index: 3, kind: input, shape index: {}]
  %s4 = inlined_call_operand.hbm [shape: bf16[2,128,384], index: 4, kind: input, shape index: {}]
  %s5 = inlined_call_operand.hbm [shape: f32[2,1,384], index: 5, kind: input, shape index: {}]
  %s6 = inlined_call_operand.hbm [shape: f32[16,128], index: 6, kind: output, shape index: {}]
  %s7 = sld [smem:[#allocation0]]
  $region89: #{tpu_custom_call.1} parent=0
    _
  %s9 = ssub.s32 1, %s7
  %s10 = scalar_select 0, %s9, %s7
  $region1: #{tpu_custom_call.1} parent=0
    #allocation6 [shape = 'u8[8192]{0}', space=vmem, size = 0x2000, scoped, tag = 'input window, operand 1, single buffered']
    #allocation7 [shape = 's32[2]{0}', space=sflag, size = 0x8, scoped, tag = 'scoped memory for tpu_custom_call.1']
    #allocation8 [shape = 's32[2]{0}', space=sflag, size = 0x8, scoped, tag = 'scoped memory for tpu_custom_call.1']
    #allocation9 [shape = 'u8[393216]{0}', space=vmem, size = 0x60000, scoped, tag = 'input window, operand 2']
    #allocation10 [shape = 's32[2]{0}', space=sflag, size = 0x8, scoped, tag = 'scoped memory for tpu_custom_call.1']
    #allocation11 [shape = 'u8[49152]{0}', space=vmem, size = 0xc000, scoped, tag = 'input window, operand 3']
    #allocation12 [shape = 'u8[196608]{0}', space=vmem, size = 0x30000, scoped, tag = 'input window, operand 4']
    #allocation13 [shape = 's32[2]{0}', space=sflag, size = 0x8, scoped, tag = 'scoped memory for tpu_custom_call.1']
    #allocation14 [shape = 'u8[3072]{0}', space=vmem, size = 0xc00, scoped, tag = 'input window, operand 5']
    #allocation15 [shape = 'u8[16384]{0}', space=vmem, size = 0x4000, scoped, tag = 'output window, operand 0']
    %11 = vsyncpa [#allocation7], 0
    %12 = vsyncpa [#allocation10], 0
    %s13 = scalar_lea.sflag [#allocation10], 1
    %14 = vsyncpa %s13, 0
    %15 = vsyncpa [#allocation13], 0
    %s16 = scalar_lea.sflag [#allocation13], 1
    %17 = vsyncpa %s16, 0
    %18 = vsyncpa [#allocation8], 0
    %s19 = scalar_lea.sflag [#allocation8], 1
    %20 = vsyncpa %s19, 0
    loop: start=0, step=1, limit=8
    $region2: #{tpu_custom_call.1} parent=1 // loop_pre_header
      _
    $region3: #{tpu_custom_call.1} parent=1 // loop_header
      %s22 = sphi 0, %s26
      %p23 = scmp.ge.s32.totalorder %s22, 8
      %s29 = sphi 0, %s48
      %s30 = sphi 0, %s44
      %s31 = sphi 0, %s40
      %s32 = sphi 0, %s29
      %s33 = sphi 0, %s30
      %s34 = sphi 0, %s31
      %s35 = sphi 0, %s32
      %s36 = sphi 0, %s33
      %s37 = sphi 0, %s34
      %s49 = sphi 0, %s49
      %s51 = sphi 0, %s49
      %s52 = sphi 0, %s51
      %s66 = sphi 0, %s52
      %s72 = sphi 0, %s74
      %s75 = sphi 0, %s72
      %s76 = sphi 0, %s75
      %s92 = sphi 0, %s76
      %s100 = sphi 0, %s102
      %s103 = sphi 0, %s100
      %s104 = sphi 0, %s103
      %s120 = sphi 0, %s104
      %s126 = sphi 0, %s128
      %s129 = sphi 0, %s126
      %s130 = sphi 0, %s129
      %s146 = sphi 0, %s130
      %s152 = sphi 0, %s154
      %s155 = sphi 0, %s152
      %s156 = sphi 0, %s155
      %s172 = sphi 0, %s156
      %s188 = sphi 0, %s190
      %s191 = sphi 0, %s188
      %s192 = sphi 0, %s191
      %s208 = sphi 0, %s192
    $region4: #{tpu_custom_call.1} parent=1 // loop_header_branch
      %25 = sbr.rel (%p23) target = $region8
    $region5: #{tpu_custom_call.1} parent=1 // loop_body
      %s27 = ssub.s32 %s22, 1
      %s28 = ssub.s32 %s22, 2
      %s38 = sadd.s32 1, %s31
      %p39 = scmp.ge.s32.totalorder %s38, 1
      %s40 = scalar_select %p39, 0, %s38
      %s41 = sadd.s32 1, %s30
      %s42 = scalar_select %p39, %s41, %s30
      %p43 = scmp.ge.s32.totalorder %s42, 3
      %s44 = scalar_select %p43, 0, %s42
      %s45 = sadd.s32 1, %s29
      %s46 = scalar_select %p43, %s45, %s29
      %p47 = scmp.ge.s32.totalorder %s46, 2
      %s48 = scalar_select %p47, 0, %s46
      %s50 = sadd.s32 %s49, 1
      %p53 = scmp.eq.s32.totalorder %s22, 5
      %p54 = scmp.ne.s32.totalorder %s49, %s51
      %p55 = scmp.eq.s32.totalorder %s22, 0
      %p56 = por %p54, %p55
      %p57 = scmp.ne.s32.totalorder %s49, %s51
      %p58 = scmp.eq.s32.totalorder %s27, 5
      %p59 = por %p57, %p58
      %p60 = scmp.ne.s32.totalorder %s51, %s52
      %p61 = scmp.eq.s32.totalorder %s27, 0
      %p62 = por %p60, %p61
      %p63 = scmp.ne.s32.totalorder %s51, %s52
      %p64 = scmp.eq.s32.totalorder %s28, 5
      %p65 = por %p63, %p64
      %p67 = scmp.ne.s32.totalorder %s52, %s66
      %p68 = scmp.eq.s32.totalorder %s28, 0
      %p69 = por %p67, %p68
      %s70 = ssub.s32 %s29, %s48
      %p71 = scmp.eq.s32.totalorder %s70, 0
      %s73 = sadd.s32 %s72, 1
      %s74 = scalar_select %p71, %s72, %s73
      %p77 = pneg %p71
      %p78 = scmp.eq.s32.totalorder %s22, 5
      %p79 = por %p77, %p78
      %p80 = scmp.ne.s32.totalorder %s72, %s75
      %p81 = scmp.eq.s32.totalorder %s22, 0
      %p82 = por %p80, %p81
      %p83 = scmp.ne.s32.totalorder %s72, %s75
      %p84 = scmp.eq.s32.totalorder %s27, 5
      %p85 = por %p83, %p84
      %p86 = scmp.ne.s32.totalorder %s75, %s76
      %p87 = scmp.eq.s32.totalorder %s27, 0
      %p88 = por %p86, %p87
      %p89 = scmp.ne.s32.totalorder %s75, %s76
      %p90 = scmp.eq.s32.totalorder %s28, 5
      %p91 = por %p89, %p90
      %p93 = scmp.ne.s32.totalorder %s76, %s92
      %p94 = scmp.eq.s32.totalorder %s28, 0
      %p95 = por %p93, %p94
      %s96 = ssub.s32 %s29, %s48
      %s97 = ssub.s32 %s31, %s40
      %s98 = sor.u32 %s96, %s97
      %p99 = scmp.eq.s32.totalorder %s98, 0
      %s101 = sadd.s32 %s100, 1
      %s102 = scalar_select %p99, %s100, %s101
      %p105 = pneg %p99
      %p106 = scmp.eq.s32.totalorder %s22, 5
      %p107 = por %p105, %p106
      %p108 = scmp.ne.s32.totalorder %s100, %s103
      %p109 = scmp.eq.s32.totalorder %s22, 0
      %p110 = por %p108, %p109
      %p111 = scmp.ne.s32.totalorder %s100, %s103
      %p112 = scmp.eq.s32.totalorder %s27, 5
      %p113 = por %p111, %p112
      %p114 = scmp.ne.s32.totalorder %s103, %s104
      %p115 = scmp.eq.s32.totalorder %s27, 0
      %p116 = por %p114, %p115
      %p117 = scmp.ne.s32.totalorder %s103, %s104
      %p118 = scmp.eq.s32.totalorder %s28, 5
      %p119 = por %p117, %p118
      %p121 = scmp.ne.s32.totalorder %s104, %s120
      %p122 = scmp.eq.s32.totalorder %s28, 0
      %p123 = por %p121, %p122
      %s124 = ssub.s32 %s29, %s48
      %p125 = scmp.eq.s32.totalorder %s124, 0
      %s127 = sadd.s32 %s126, 1
      %s128 = scalar_select %p125, %s126, %s127
      %p131 = pneg %p125
      %p132 = scmp.eq.s32.totalorder %s22, 5
      %p133 = por %p131, %p132
      %p134 = scmp.ne.s32.totalorder %s126, %s129
      %p135 = scmp.eq.s32.totalorder %s22, 0
      %p136 = por %p134, %p135
      %p137 = scmp.ne.s32.totalorder %s126, %s129
      %p138 = scmp.eq.s32.totalorder %s27, 5
      %p139 = por %p137, %p138
      %p140 = scmp.ne.s32.totalorder %s129, %s130
      %p141 = scmp.eq.s32.totalorder %s27, 0
      %p142 = por %p140, %p141
      %p143 = scmp.ne.s32.totalorder %s129, %s130
      %p144 = scmp.eq.s32.totalorder %s28, 5
      %p145 = por %p143, %p144
      %p147 = scmp.ne.s32.totalorder %s130, %s146
      %p148 = scmp.eq.s32.totalorder %s28, 0
      %p149 = por %p147, %p148
      %s150 = ssub.s32 %s29, %s48
      %p151 = scmp.eq.s32.totalorder %s150, 0
      %s153 = sadd.s32 %s152, 1
      %s154 = scalar_select %p151, %s152, %s153
      %p157 = pneg %p151
      %p158 = scmp.eq.s32.totalorder %s22, 5
      %p159 = por %p157, %p158
      %p160 = scmp.ne.s32.totalorder %s152, %s155
      %p161 = scmp.eq.s32.totalorder %s22, 0
      %p162 = por %p160, %p161
      %p163 = scmp.ne.s32.totalorder %s152, %s155
      %p164 = scmp.eq.s32.totalorder %s27, 5
      %p165 = por %p163, %p164
      %p166 = scmp.ne.s32.totalorder %s155, %s156
      %p167 = scmp.eq.s32.totalorder %s27, 0
      %p168 = por %p166, %p167
      %p169 = scmp.ne.s32.totalorder %s155, %s156
      %p170 = scmp.eq.s32.totalorder %s28, 5
      %p171 = por %p169, %p170
      %p173 = scmp.ne.s32.totalorder %s156, %s172
      %p174 = scmp.eq.s32.totalorder %s28, 0
      %p175 = por %p173, %p174
      %p176 = scmp.eq.s32.totalorder %s29, 1
      %p177 = scmp.eq.s32.totalorder %s30, 2
      %p178 = pnand %p176, %p177
      %p179 = pneg %p178
      %s180 = scalar_select %p179, %s31, 0
      %p181 = scmp.eq.s32.totalorder %s48, 1
      %p182 = scmp.eq.s32.totalorder %s44, 2
      %p183 = pnand %p181, %p182
      %p184 = pneg %p183
      %s185 = scalar_select %p184, %s40, 0
      %s186 = ssub.s32 %s180, %s185
      %p187 = scmp.eq.s32.totalorder %s186, 0
      %s189 = sadd.s32 %s188, 1
      %s190 = scalar_select %p187, %s188, %s189
      %p193 = pneg %p187
      %p194 = scmp.eq.s32.totalorder %s22, 5
      %p195 = por %p193, %p194
      %p196 = scmp.ne.s32.totalorder %s188, %s191
      %p197 = scmp.eq.s32.totalorder %s22, 0
      %p198 = por %p196, %p197
      %p199 = scmp.ne.s32.totalorder %s188, %s191
      %p200 = scmp.eq.s32.totalorder %s27, 5
      %p201 = por %p199, %p200
      %p202 = scmp.ne.s32.totalorder %s191, %s192
      %p203 = scmp.eq.s32.totalorder %s27, 0
      %p204 = por %p202, %p203
      %p205 = scmp.ne.s32.totalorder %s191, %s192
      %p206 = scmp.eq.s32.totalorder %s28, 5
      %p207 = por %p205, %p206
      %p209 = scmp.ne.s32.totalorder %s192, %s208
      %p210 = scmp.eq.s32.totalorder %s28, 0
      %p211 = por %p209, %p210
      %p212 = scmp.le.s32.totalorder 1, %s22
      %p213 = scmp.lt.s32.totalorder %s22, 7
      %p214 = pnand %p212, %p213
      %p215 = pneg %p214
      // Predicated region
      $region9: #{tpu_custom_call.1} parent=5 // pred_check
        _
      $region10: #{tpu_custom_call.1} parent=5 // pred_check_branch
        %217 = sbr.rel (%p214) target = $region12
      $region11: #{tpu_custom_call.1} parent=5 // pred_region
        %s218 = ssub.s32 %s22, 1
        // Predicated region
        $region13: #{tpu_custom_call.1} parent=11 // pred_check
          %p219 = pneg %p62
        $region14: #{tpu_custom_call.1} parent=11 // pred_check_branch
          %221 = sbr.rel (%p219) target = $region16
        $region15: #{tpu_custom_call.1} parent=11 // pred_region
          %223 = vsyncadd [#allocation7], 0
          %s224 = sshll.u32 %s1, 4
          %s225 = int_to_ptr.hbm [resolvable:$true] %s224
          %s226 = sshll.u32 [#allocation6], 4
          %s227 = int_to_ptr.vmem [resolvable:$true] %s226
          %232 = dma.hbm_to_vmem [thread:$0]  %s225, 256, %s227, [#allocation7], 64, 64, 4
        $region16: #{tpu_custom_call.1} parent=11 // pred_fallthru
          _
      $region12: #{tpu_custom_call.1} parent=5 // pred_fallthru
        _
      %p233 = scmp.lt.s32.totalorder %s22, 6
      // Predicated region
      $region17: #{tpu_custom_call.1} parent=5 // pred_check
        %p234 = pneg %p233
      $region18: #{tpu_custom_call.1} parent=5 // pred_check_branch
        %236 = sbr.rel (%p234) target = $region20
      $region19: #{tpu_custom_call.1} parent=5 // pred_region
        // Predicated region
        $region21: #{tpu_custom_call.1} parent=19 // pred_check
          %p237 = pneg %p82
        $region22: #{tpu_custom_call.1} parent=19 // pred_check_branch
          %239 = sbr.rel (%p237) target = $region24
        $region23: #{tpu_custom_call.1} parent=19 // pred_region
          %s240 = sand.u32 %s22, 1
          %s241 = scalar_lea.sflag [#allocation10], %s240
          %s242 = sand.u32 %s72, 1
          %s243 = smul.addr %s242, 384
          %s244 = scalar_lea.vmem [#allocation9], %s243
          %246 = vsyncadd %s241, 0
          %s247 = smul.addr %s29, 96
          %s248 = smul.addr %s247, 4
          %s249 = scalar_lea.hbm %s2, %s248
          %s250 = sshll.u32 %s249, 4
          %s251 = int_to_ptr.hbm [resolvable:$true] %s250
          %s252 = sshll.u32 %s244, 4
          %s253 = int_to_ptr.vmem [resolvable:$true] %s252
          %258 = dma.hbm_to_vmem [thread:$0]  %s251, 6144, %s253, %s241, 384, 384, 24
        $region24: #{tpu_custom_call.1} parent=19 // pred_fallthru
          _
        // Predicated region
        $region25: #{tpu_custom_call.1} parent=19 // pred_check
          %p259 = pneg %p110
        $region26: #{tpu_custom_call.1} parent=19 // pred_check_branch
          %261 = sbr.rel (%p259) target = $region28
        $region27: #{tpu_custom_call.1} parent=19 // pred_region
          %s262 = sand.u32 %s22, 1
          %s263 = scalar_lea.sflag [#allocation10], %s262
          %s264 = sand.u32 %s100, 1
          %s265 = smul.addr %s264, 48
          %s266 = scalar_lea.vmem [#allocation11], %s265
          %s267 = smul.u32 2, %s31
          %269 = vsyncadd %s263, 0
          %s270 = smul.addr %s267, 3
          %s271 = smul.addr %s29, 6
          %s272 = sadd.s32 %s270, %s271
          %s273 = smul.addr %s272, 8
          %s274 = scalar_lea.hbm %s3, %s273
          %s275 = sshll.u32 %s274, 4
          %s276 = int_to_ptr.hbm [resolvable:$true] %s275
          %s277 = sshll.u32 %s266, 4
          %s278 = int_to_ptr.vmem [resolvable:$true] %s277
          %283 = dma.hbm_to_vmem [thread:$0]  %s276, 768, %s278, %s263, 384, 384, 24
        $region28: #{tpu_custom_call.1} parent=19 // pred_fallthru
          _
        // Predicated region
        $region29: #{tpu_custom_call.1} parent=19 // pred_check
          %p284 = pneg %p136
        $region30: #{tpu_custom_call.1} parent=19 // pred_check_branch
          %286 = sbr.rel (%p284) target = $region32
        $region31: #{tpu_custom_call.1} parent=19 // pred_region
          %s287 = sand.u32 %s22, 1
          %s288 = scalar_lea.sflag [#allocation13], %s287
          %s289 = sand.u32 %s126, 1
          %s290 = smul.addr %s289, 192
          %s291 = scalar_lea.vmem [#allocation12], %s290
          %293 = vsyncadd %s288, 0
          %s294 = smul.addr %s29, 48
          %s295 = smul.addr %s294, 4
          %s296 = scalar_lea.hbm %s4, %s295
          %s297 = sshll.u32 %s296, 4
          %s298 = int_to_ptr.hbm [resolvable:$true] %s297
          %s299 = sshll.u32 %s291, 4
          %s300 = int_to_ptr.vmem [resolvable:$true] %s299
          %305 = dma.hbm_to_vmem [thread:$0]  %s298, 3072, %s300, %s288, 192, 192, 12
        $region32: #{tpu_custom_call.1} parent=19 // pred_fallthru
          _
        // Predicated region
        $region33: #{tpu_custom_call.1} parent=19 // pred_check
          %p306 = pneg %p162
        $region34: #{tpu_custom_call.1} parent=19 // pred_check_branch
          %308 = sbr.rel (%p306) target = $region36
        $region35: #{tpu_custom_call.1} parent=19 // pred_region
          %s309 = sand.u32 %s22, 1
          %s310 = scalar_lea.sflag [#allocation13], %s309
          %s311 = sand.u32 %s152, 1
          %s312 = smul.addr %s311, 3
          %s313 = scalar_lea.vmem [#allocation14], %s312
          %315 = vsyncadd %s310, 0
          %s316 = smul.addr %s29, 3
          %s317 = scalar_lea.hbm %s5, %s316
          %s319 = sshll.u32 %s317, 4
          %s320 = int_to_ptr.hbm [resolvable:$true] %s319
          %s321 = sshll.u32 %s313, 4
          %s322 = int_to_ptr.vmem [resolvable:$true] %s321
          %324 = dma.hbm_to_vmem [thread:$0]  %s320, 48, %s322, %s310
        $region36: #{tpu_custom_call.1} parent=19 // pred_fallthru
          _
      $region20: #{tpu_custom_call.1} parent=5 // pred_fallthru
        _
      %p325 = scmp.le.s32.totalorder 1, %s22
      %p326 = scmp.lt.s32.totalorder %s22, 7
      %p327 = pnand %p325, %p326
      %p328 = pneg %p327
      // Predicated region
      $region37: #{tpu_custom_call.1} parent=5 // pred_check
        _
      $region38: #{tpu_custom_call.1} parent=5 // pred_check_branch
        %330 = sbr.rel (%p327) target = $region40
      $region39: #{tpu_custom_call.1} parent=5 // pred_region
        %s331 = ssub.s32 %s22, 1
        // Predicated region
        $region41: #{tpu_custom_call.1} parent=39 // pred_check
          %p332 = pneg %p62
        $region42: #{tpu_custom_call.1} parent=39 // pred_check_branch
          %334 = sbr.rel (%p332) target = $region44
        $region43: #{tpu_custom_call.1} parent=39 // pred_region
          %336 = dma.done [#allocation7], 256
        $region44: #{tpu_custom_call.1} parent=39 // pred_fallthru
          _
        %s337 = sand.u32 %s27, 1
        %s338 = scalar_lea.sflag [#allocation10], %s337
        %s339 = sand.u32 %s75, 1
        %s340 = smul.addr %s339, 384
        %s341 = scalar_lea.vmem [#allocation9], %s340
        // Predicated region
        $region45: #{tpu_custom_call.1} parent=39 // pred_check
          %p342 = pneg %p88
        $region46: #{tpu_custom_call.1} parent=39 // pred_check_branch
          %344 = sbr.rel (%p342) target = $region48
        $region47: #{tpu_custom_call.1} parent=39 // pred_region
          %346 = dma.done %s338, 6144
        $region48: #{tpu_custom_call.1} parent=39 // pred_fallthru
          _
        %s347 = sand.u32 %s27, 1
        %s348 = scalar_lea.sflag [#allocation10], %s347
        %s349 = sand.u32 %s103, 1
        %s350 = smul.addr %s349, 48
        %s351 = scalar_lea.vmem [#allocation11], %s350
        // Predicated region
        $region49: #{tpu_custom_call.1} parent=39 // pred_check
          %p352 = pneg %p116
        $region50: #{tpu_custom_call.1} parent=39 // pred_check_branch
          %354 = sbr.rel (%p352) target = $region52
        $region51: #{tpu_custom_call.1} parent=39 // pred_region
          %356 = dma.done %s348, 768
        $region52: #{tpu_custom_call.1} parent=39 // pred_fallthru
          _
        %s357 = sand.u32 %s27, 1
        %s358 = scalar_lea.sflag [#allocation13], %s357
        %s359 = sand.u32 %s129, 1
        %s360 = smul.addr %s359, 192
        %s361 = scalar_lea.vmem [#allocation12], %s360
        // Predicated region
        $region53: #{tpu_custom_call.1} parent=39 // pred_check
          %p362 = pneg %p142
        $region54: #{tpu_custom_call.1} parent=39 // pred_check_branch
          %364 = sbr.rel (%p362) target = $region56
        $region55: #{tpu_custom_call.1} parent=39 // pred_region
          %366 = dma.done %s358, 3072
        $region56: #{tpu_custom_call.1} parent=39 // pred_fallthru
          _
        %s367 = sand.u32 %s27, 1
        %s368 = scalar_lea.sflag [#allocation13], %s367
        %s369 = sand.u32 %s155, 1
        %s370 = smul.addr %s369, 3
        %s371 = scalar_lea.vmem [#allocation14], %s370
        // Predicated region
        $region57: #{tpu_custom_call.1} parent=39 // pred_check
          %p372 = pneg %p168
        $region58: #{tpu_custom_call.1} parent=39 // pred_check_branch
          %374 = sbr.rel (%p372) target = $region60
        $region59: #{tpu_custom_call.1} parent=39 // pred_region
          %376 = dma.done %s368, 48
        $region60: #{tpu_custom_call.1} parent=39 // pred_fallthru
          _
        %p377 = pneg %p62
        %p378 = pneg %p59
        %s379 = sand.u32 %s27, 1
        %s380 = scalar_lea.sflag [#allocation10], %s379
        %s381 = sand.u32 %s75, 1
        %s382 = smul.addr %s381, 384
        %s383 = scalar_lea.vmem [#allocation9], %s382
        %p384 = pneg %p88
        %p385 = pneg %p85
        %s386 = sand.u32 %s27, 1
        %s387 = scalar_lea.sflag [#allocation10], %s386
        %s388 = sand.u32 %s103, 1
        %s389 = smul.addr %s388, 48
        %s390 = scalar_lea.vmem [#allocation11], %s389
        %p391 = pneg %p116
        %p392 = pneg %p113
        %s393 = sand.u32 %s27, 1
        %s394 = scalar_lea.sflag [#allocation13], %s393
        %s395 = sand.u32 %s129, 1
        %s396 = smul.addr %s395, 192
        %s397 = scalar_lea.vmem [#allocation12], %s396
        %p398 = pneg %p142
        %p399 = pneg %p139
        %s400 = sand.u32 %s27, 1
        %s401 = scalar_lea.sflag [#allocation13], %s400
        %s402 = sand.u32 %s155, 1
        %s403 = smul.addr %s402, 3
        %s404 = scalar_lea.vmem [#allocation14], %s403
        %p405 = pneg %p168
        %p406 = pneg %p165
        %p407 = pneg %p204
        %p408 = pneg %p201
        %s409 = sand.u32 %s191, 1
        %s410 = scalar_lea.sflag [#allocation8], %s409
        %s411 = sand.u32 %s191, 1
        %s412 = smul.addr %s411, 16
        %s413 = scalar_lea.vmem [#allocation15], %s412
        %s414 = smul.u32 2, %s34
        %p415 = scmp.eq.s32.totalorder %s32, 1
        %p416 = scmp.eq.s32.totalorder %s33, 2
        %p417 = pnand %p415, %p416
        %p418 = pneg %p417
        %s419 = scalar_select %p418, %s34, 0
        %s420 = smul.u32 2, %s419
        %p422 = scmp.eq.s32.totalorder %s32, 0
        %p423 = scmp.eq.s32.totalorder %s33, 0
        %p424 = pnand %p422, %p423
        %p425 = pneg %p424
        %p426 = scmp.eq.s32.totalorder %s34, 0
        %p427 = pnand %p425, %p426
        %p428 = pneg %p427
        // Predicated region
        $region61: #{tpu_custom_call.1} parent=39 // pred_check
          _
        $region62: #{tpu_custom_call.1} parent=39 // pred_check_branch
          %430 = sbr.rel (%p427) target = $region64
        $region63: #{tpu_custom_call.1} parent=39 // pred_region
          // Predicated region
          $region65: #{tpu_custom_call.1} parent=63 // pred_check
            _
          $region66: #{tpu_custom_call.1} parent=63 // pred_check_branch
            %432 = sbr.rel target = $region68
          $region67: #{tpu_custom_call.1} parent=63 // pred_region
            %433 = sst [smem:[#allocation18]] [#allocation17]
            %434 = sst [smem:[#allocation19]] [#allocation16]
          $region68: #{tpu_custom_call.1} parent=63 // pred_fallthru
            _
          %436 = shalt.err (0)
          %s438 = sshll.u32 %s0, 4
          %s439 = int_to_ptr.hbm [resolvable:$true] %s438
          %s440 = sshll.u32 [#allocation2], 4
          %s441 = int_to_ptr.vmem [resolvable:$true] %s440
          %443 = dma.hbm_to_vmem [thread:$0]  %s439, 256, %s441, [#allocation5]
          %s444 = smul.u32 16, 1
          %s445 = sshll.u32 %s444, 4
          %446 = dma.done [#allocation5], %s445
          %v447 = vld [vmem:[#allocation2] sm:$0xff]
          %v448 = vld [vmem:[#allocation2 + $0x8] sm:$0xff]
          %v449 = vpack.c.bf16 %v447, %v447
          %v450 = vpack.c.bf16 %v448, %v448
          %451 = vst [vmem:[#allocation3] sm:$0xf] %v449
          %452 = vst [vmem:[#allocation3 + $0x4] sm:$0xf] %v450
        $region64: #{tpu_custom_call.1} parent=39 // pred_fallthru
          _
        // Predicated region
        $region69: #{tpu_custom_call.1} parent=39 // pred_check
          %p453 = pneg %p426
        $region70: #{tpu_custom_call.1} parent=39 // pred_check_branch
          %455 = sbr.rel (%p453) target = $region72
        $region71: #{tpu_custom_call.1} parent=39 // pred_region
          %v456 = vld [vmem:[#allocation3] sm:$0xf]
          %v457 = vld [vmem:[#allocation3 + $0x4] sm:$0xf]
          %v458 = vld [vmem:[%s341] sm:$0xff]
          %v459 = vld [vmem:[%s341 + $0x8] sm:$0xff]
          %v460 = vld [vmem:[%s341 + $0x10] sm:$0xff]
          %v461 = vld [vmem:[%s341 + $0x18] sm:$0xff]
          %v462 = vld [vmem:[%s341 + $0x20] sm:$0xff]
          %v463 = vld [vmem:[%s341 + $0x28] sm:$0xff]
          %v464 = vld [vmem:[%s341 + $0x30] sm:$0xff]
          %v465 = vld [vmem:[%s341 + $0x38] sm:$0xff]
          %v466 = vld [vmem:[%s341 + $0x40] sm:$0xff]
          %v467 = vld [vmem:[%s341 + $0x48] sm:$0xff]
          %v468 = vld [vmem:[%s341 + $0x50] sm:$0xff]
          %v469 = vld [vmem:[%s341 + $0x58] sm:$0xff]
          %v470 = vld [vmem:[%s341 + $0x60] sm:$0xff]
          %v471 = vld [vmem:[%s341 + $0x68] sm:$0xff]
          %v472 = vld [vmem:[%s341 + $0x70] sm:$0xff]
          %v473 = vld [vmem:[%s341 + $0x78] sm:$0xff]
          %v474 = vld [vmem:[%s341 + $0x80] sm:$0xff]
          %v475 = vld [vmem:[%s341 + $0x88] sm:$0xff]
          %v476 = vld [vmem:[%s341 + $0x90] sm:$0xff]
          %v477 = vld [vmem:[%s341 + $0x98] sm:$0xff]
          %v478 = vld [vmem:[%s341 + $0xa0] sm:$0xff]
          %v479 = vld [vmem:[%s341 + $0xa8] sm:$0xff]
          %v480 = vld [vmem:[%s341 + $0xb0] sm:$0xff]
          %v481 = vld [vmem:[%s341 + $0xb8] sm:$0xff]
          %v482 = vld [vmem:[%s341 + $0xc0] sm:$0xff]
          %v483 = vld [vmem:[%s341 + $0xc8] sm:$0xff]
          %v484 = vld [vmem:[%s341 + $0xd0] sm:$0xff]
          %v485 = vld [vmem:[%s341 + $0xd8] sm:$0xff]
          %v486 = vld [vmem:[%s341 + $0xe0] sm:$0xff]
          %v487 = vld [vmem:[%s341 + $0xe8] sm:$0xff]
          %v488 = vld [vmem:[%s341 + $0xf0] sm:$0xff]
          %v489 = vld [vmem:[%s341 + $0xf8] sm:$0xff]
          %v490 = vld [vmem:[%s341 + $0x100] sm:$0xff]
          %v491 = vld [vmem:[%s341 + $0x108] sm:$0xff]
          %v492 = vld [vmem:[%s341 + $0x110] sm:$0xff]
          %v493 = vld [vmem:[%s341 + $0x118] sm:$0xff]
          %v494 = vld [vmem:[%s341 + $0x120] sm:$0xff]
          %v495 = vld [vmem:[%s341 + $0x128] sm:$0xff]
          %v496 = vld [vmem:[%s341 + $0x130] sm:$0xff]
          %v497 = vld [vmem:[%s341 + $0x138] sm:$0xff]
          %v498 = vld [vmem:[%s341 + $0x140] sm:$0xff]
          %v499 = vld [vmem:[%s341 + $0x148] sm:$0xff]
          %v500 = vld [vmem:[%s341 + $0x150] sm:$0xff]
          %v501 = vld [vmem:[%s341 + $0x158] sm:$0xff]
          %v502 = vld [vmem:[%s341 + $0x160] sm:$0xff]
          %v503 = vld [vmem:[%s341 + $0x168] sm:$0xff]
          %v504 = vld [vmem:[%s341 + $0x170] sm:$0xff]
          %v505 = vld [vmem:[%s341 + $0x178] sm:$0xff]
          %v508 = vunpack.c.l.b16 %v456
          %v509 = vunpack.c.l.b16 %v457
          %v510 = vpack.c.b16 %v509, %v508
          %v560 = vunpack.c.l.b16 %v458
          %v561 = vunpack.c.h.b16 %v458
          %v562 = vunpack.c.l.b16 %v459
          %v563 = vunpack.c.h.b16 %v459
          %v564 = vunpack.c.l.b16 %v460
          %v565 = vunpack.c.h.b16 %v460
          %v566 = vunpack.c.l.b16 %v461
          %v567 = vunpack.c.h.b16 %v461
          %v568 = vunpack.c.l.b16 %v462
          %v569 = vunpack.c.h.b16 %v462
          %v570 = vunpack.c.l.b16 %v463
          %v571 = vunpack.c.h.b16 %v463
          %v572 = vunpack.c.l.b16 %v464
          %v573 = vunpack.c.h.b16 %v464
          %v574 = vunpack.c.l.b16 %v465
          %v575 = vunpack.c.h.b16 %v465
          %v576 = vunpack.c.l.b16 %v466
          %v577 = vunpack.c.h.b16 %v466
          %v578 = vunpack.c.l.b16 %v467
          %v579 = vunpack.c.h.b16 %v467
          %v580 = vunpack.c.l.b16 %v468
          %v581 = vunpack.c.h.b16 %v468
          %v582 = vunpack.c.l.b16 %v469
          %v583 = vunpack.c.h.b16 %v469
          %v584 = vunpack.c.l.b16 %v470
          %v585 = vunpack.c.h.b16 %v470
          %v586 = vunpack.c.l.b16 %v471
          %v587 = vunpack.c.h.b16 %v471
          %v588 = vunpack.c.l.b16 %v472
          %v589 = vunpack.c.h.b16 %v472
          %v590 = vunpack.c.l.b16 %v473
          %v591 = vunpack.c.h.b16 %v473
          %v592 = vunpack.c.l.b16 %v474
          %v593 = vunpack.c.h.b16 %v474
          %v594 = vunpack.c.l.b16 %v475
          %v595 = vunpack.c.h.b16 %v475
          %v596 = vunpack.c.l.b16 %v476
          %v597 = vunpack.c.h.b16 %v476
          %v598 = vunpack.c.l.b16 %v477
          %v599 = vunpack.c.h.b16 %v477
          %v600 = vunpack.c.l.b16 %v478
          %v601 = vunpack.c.h.b16 %v478
          %v602 = vunpack.c.l.b16 %v479
          %v603 = vunpack.c.h.b16 %v479
          %v604 = vunpack.c.l.b16 %v480
          %v605 = vunpack.c.h.b16 %v480
          %v606 = vunpack.c.l.b16 %v481
          %v607 = vunpack.c.h.b16 %v481
          %v608 = vunpack.c.l.b16 %v482
          %v609 = vunpack.c.h.b16 %v482
          %v610 = vunpack.c.l.b16 %v483
          %v611 = vunpack.c.h.b16 %v483
          %v612 = vunpack.c.l.b16 %v484
          %v613 = vunpack.c.h.b16 %v484
          %v614 = vunpack.c.l.b16 %v485
          %v615 = vunpack.c.h.b16 %v485
          %v616 = vunpack.c.l.b16 %v486
          %v617 = vunpack.c.h.b16 %v486
          %v618 = vunpack.c.l.b16 %v487
          %v619 = vunpack.c.h.b16 %v487
          %v620 = vunpack.c.l.b16 %v488
          %v621 = vunpack.c.h.b16 %v488
          %v622 = vunpack.c.l.b16 %v489
          %v623 = vunpack.c.h.b16 %v489
          %v624 = vunpack.c.l.b16 %v490
          %v625 = vunpack.c.h.b16 %v490
          %v626 = vunpack.c.l.b16 %v491
          %v627 = vunpack.c.h.b16 %v491
          %v628 = vunpack.c.l.b16 %v492
          %v629 = vunpack.c.h.b16 %v492
          %v630 = vunpack.c.l.b16 %v493
          %v631 = vunpack.c.h.b16 %v493
          %v632 = vunpack.c.l.b16 %v494
          %v633 = vunpack.c.h.b16 %v494
          %v634 = vunpack.c.l.b16 %v495
          %v635 = vunpack.c.h.b16 %v495
          %v636 = vunpack.c.l.b16 %v496
          %v637 = vunpack.c.h.b16 %v496
          %v638 = vunpack.c.l.b16 %v497
          %v639 = vunpack.c.h.b16 %v497
          %v640 = vunpack.c.l.b16 %v498
          %v641 = vunpack.c.h.b16 %v498
          %v642 = vunpack.c.l.b16 %v499
          %v643 = vunpack.c.h.b16 %v499
          %v644 = vunpack.c.l.b16 %v500
          %v645 = vunpack.c.h.b16 %v500
          %v646 = vunpack.c.l.b16 %v501
          %v647 = vunpack.c.h.b16 %v501
          %v648 = vunpack.c.l.b16 %v502
          %v649 = vunpack.c.h.b16 %v502
          %v650 = vunpack.c.l.b16 %v503
          %v651 = vunpack.c.h.b16 %v503
          %v652 = vunpack.c.l.b16 %v504
          %v653 = vunpack.c.h.b16 %v504
          %v654 = vunpack.c.l.b16 %v505
          %v655 = vunpack.c.h.b16 %v505
          %v656 = vpack.c.b16 %v566, %v560
          %v657 = vpack.c.b16 %v567, %v561
          %v658 = vpack.c.b16 %v568, %v562
          %v659 = vpack.c.b16 %v569, %v563
          %v660 = vpack.c.b16 %v570, %v564
          %v661 = vpack.c.b16 %v571, %v565
          %v662 = vpack.c.b16 %v578, %v572
          %v663 = vpack.c.b16 %v579, %v573
          %v664 = vpack.c.b16 %v580, %v574
          %v665 = vpack.c.b16 %v581, %v575
          %v666 = vpack.c.b16 %v582, %v576
          %v667 = vpack.c.b16 %v583, %v577
          %v668 = vpack.c.b16 %v590, %v584
          %v669 = vpack.c.b16 %v591, %v585
          %v670 = vpack.c.b16 %v592, %v586
          %v671 = vpack.c.b16 %v593, %v587
          %v672 = vpack.c.b16 %v594, %v588
          %v673 = vpack.c.b16 %v595, %v589
          %v674 = vpack.c.b16 %v602, %v596
          %v675 = vpack.c.b16 %v603, %v597
          %v676 = vpack.c.b16 %v604, %v598
          %v677 = vpack.c.b16 %v605, %v599
          %v678 = vpack.c.b16 %v606, %v600
          %v679 = vpack.c.b16 %v607, %v601
          %v680 = vpack.c.b16 %v614, %v608
          %v681 = vpack.c.b16 %v615, %v609
          %v682 = vpack.c.b16 %v616, %v610
          %v683 = vpack.c.b16 %v617, %v611
          %v684 = vpack.c.b16 %v618, %v612
          %v685 = vpack.c.b16 %v619, %v613
          %v686 = vpack.c.b16 %v626, %v620
          %v687 = vpack.c.b16 %v627, %v621
          %v688 = vpack.c.b16 %v628, %v622
          %v689 = vpack.c.b16 %v629, %v623
          %v690 = vpack.c.b16 %v630, %v624
          %v691 = vpack.c.b16 %v631, %v625
          %v692 = vpack.c.b16 %v638, %v632
          %v693 = vpack.c.b16 %v639, %v633
          %v694 = vpack.c.b16 %v640, %v634
          %v695 = vpack.c.b16 %v641, %v635
          %v696 = vpack.c.b16 %v642, %v636
          %v697 = vpack.c.b16 %v643, %v637
          %v698 = vpack.c.b16 %v650, %v644
          %v699 = vpack.c.b16 %v651, %v645
          %v700 = vpack.c.b16 %v652, %v646
          %v701 = vpack.c.b16 %v653, %v647
          %v702 = vpack.c.b16 %v654, %v648
          %v703 = vpack.c.b16 %v655, %v649
          %752 = vmatpush.bf16.msra.mxu0 %v698
          %753 = vmatpush.bf16.msra.mxu0 %v692
          %754 = vmatpush.bf16.msra.mxu0 %v686
          %755 = vmatpush.bf16.msra.mxu0 %v680
          %756 = vmatpush.bf16.msra.mxu0 %v674
          %757 = vmatpush.bf16.msra.mxu0 %v668
          %758 = vmatpush.bf16.msra.mxu0 %v662
          %759 = vmatpush.bf16.msra.mxu0 %v656
          %760 = vmatmul.bf16.gmra.mxu0 %v510
          %v761 = vpop.f32.mrf.mxu0
          %v762 = vadd.f32 0.0, %v761
          %v763 = vpop.f32.mrf.mxu0
          %v764 = vadd.f32 0.0, %v763
          %765 = vdwg.mxu0
          %766 = vmatpush.bf16.msra.mxu0 %v699
          %767 = vmatpush.bf16.msra.mxu0 %v693
          %768 = vmatpush.bf16.msra.mxu0 %v687
          %769 = vmatpush.bf16.msra.mxu0 %v681
          %770 = vmatpush.bf16.msra.mxu0 %v675
          %771 = vmatpush.bf16.msra.mxu0 %v669
          %772 = vmatpush.bf16.msra.mxu0 %v663
          %773 = vmatpush.bf16.msra.mxu0 %v657
          %774 = vmatmul.bf16.gmra.mxu0 %v510
          %v775 = vpop.f32.mrf.mxu0
          %v776 = vadd.f32 0.0, %v775
          %v777 = vpop.f32.mrf.mxu0
          %v778 = vadd.f32 0.0, %v777
          %779 = vdwg.mxu0
          %780 = vmatpush.bf16.msra.mxu0 %v700
          %781 = vmatpush.bf16.msra.mxu0 %v694
          %782 = vmatpush.bf16.msra.mxu0 %v688
          %783 = vmatpush.bf16.msra.mxu0 %v682
          %784 = vmatpush.bf16.msra.mxu0 %v676
          %785 = vmatpush.bf16.msra.mxu0 %v670
          %786 = vmatpush.bf16.msra.mxu0 %v664
          %787 = vmatpush.bf16.msra.mxu0 %v658
          %788 = vmatmul.bf16.gmra.mxu0 %v510
          %v789 = vpop.f32.mrf.mxu0
          %v790 = vadd.f32 0.0, %v789
          %v791 = vpop.f32.mrf.mxu0
          %v792 = vadd.f32 0.0, %v791
          %793 = vdwg.mxu0
          %794 = vmatpush.bf16.msra.mxu0 %v701
          %795 = vmatpush.bf16.msra.mxu0 %v695
          %796 = vmatpush.bf16.msra.mxu0 %v689
          %797 = vmatpush.bf16.msra.mxu0 %v683
          %798 = vmatpush.bf16.msra.mxu0 %v677
          %799 = vmatpush.bf16.msra.mxu0 %v671
          %800 = vmatpush.bf16.msra.mxu0 %v665
          %801 = vmatpush.bf16.msra.mxu0 %v659
          %802 = vmatmul.bf16.gmra.mxu0 %v510
          %v803 = vpop.f32.mrf.mxu0
          %v804 = vadd.f32 0.0, %v803
          %v805 = vpop.f32.mrf.mxu0
          %v806 = vadd.f32 0.0, %v805
          %807 = vdwg.mxu0
          %808 = vmatpush.bf16.msra.mxu0 %v702
          %809 = vmatpush.bf16.msra.mxu0 %v696
          %810 = vmatpush.bf16.msra.mxu0 %v690
          %811 = vmatpush.bf16.msra.mxu0 %v684
          %812 = vmatpush.bf16.msra.mxu0 %v678
          %813 = vmatpush.bf16.msra.mxu0 %v672
          %814 = vmatpush.bf16.msra.mxu0 %v666
          %815 = vmatpush.bf16.msra.mxu0 %v660
          %816 = vmatmul.bf16.gmra.mxu0 %v510
          %v817 = vpop.f32.mrf.mxu0
          %v818 = vadd.f32 0.0, %v817
          %v819 = vpop.f32.mrf.mxu0
          %v820 = vadd.f32 0.0, %v819
          %821 = vdwg.mxu0
          %822 = vmatpush.bf16.msra.mxu0 %v703
          %823 = vmatpush.bf16.msra.mxu0 %v697
          %824 = vmatpush.bf16.msra.mxu0 %v691
          %825 = vmatpush.bf16.msra.mxu0 %v685
          %826 = vmatpush.bf16.msra.mxu0 %v679
          %827 = vmatpush.bf16.msra.mxu0 %v673
          %828 = vmatpush.bf16.msra.mxu0 %v667
          %829 = vmatpush.bf16.msra.mxu0 %v661
          %830 = vmatmul.bf16.gmra.mxu0 %v510
          %v831 = vpop.f32.mrf.mxu0
          %v832 = vadd.f32 0.0, %v831
          %v833 = vpop.f32.mrf.mxu0
          %v834 = vadd.f32 0.0, %v833
          %835 = vdwg.mxu0
          %v836 = vpack.c.bf16 %v776, %v762
          %v837 = vpack.c.bf16 %v804, %v790
          %v838 = vpack.c.bf16 %v832, %v818
          %v839 = vpack.c.bf16 %v778, %v764
          %v840 = vpack.c.bf16 %v806, %v792
          %v841 = vpack.c.bf16 %v834, %v820
          %842 = vst [vmem:[#allocation4] sm:$0xff] %v836
          %843 = vst [vmem:[#allocation4 + $0x8] sm:$0xff] %v837
          %844 = vst [vmem:[#allocation4 + $0x10] sm:$0xff] %v838
          %845 = vst [vmem:[#allocation4 + $0x18] sm:$0xff] %v839
          %846 = vst [vmem:[#allocation4 + $0x20] sm:$0xff] %v840
          %847 = vst [vmem:[#allocation4 + $0x28] sm:$0xff] %v841
        $region72: #{tpu_custom_call.1} parent=39 // pred_fallthru
          _
        %s848 = smul.u32 %s34, 16
        %v849 = vld [vmem:[%s351] sm:$0xff]
        %v850 = vld [vmem:[%s351 + $0x8] sm:$0xff]
        %v851 = vld [vmem:[%s351 + $0x10] sm:$0xff]
        %v852 = vld [vmem:[%s351 + $0x18] sm:$0xff]
        %v853 = vld [vmem:[%s351 + $0x20] sm:$0xff]
        %v854 = vld [vmem:[%s351 + $0x28] sm:$0xff]
        %s855 = sshra.s32 %s848, 3
        %s856 = sand.u32 %s848, 7
        %s857 = smul.addr %s855, 4
        %s858 = scalar_lea.vmem [#allocation6], %s857
        %v859 = vld [vmem:[%s858] sm:$0xf]
        %v860 = vld [vmem:[%s858 + $0x4] sm:$0xf]
        %v861 = vld [vmem:[#allocation4] sm:$0xff]
        %v862 = vld [vmem:[#allocation4 + $0x8] sm:$0xf]
        %v863 = vld [vmem:[#allocation4 + $0x18] sm:$0xff]
        %v864 = vld [vmem:[#allocation4 + $0x20] sm:$0xf]
        %v867 = vunpack.c.l.b16 %v859
        %v868 = vunpack.c.l.b16 %v860
        %v869 = vpack.c.b16 %v868, %v867
        %v874 = vunpack.c.l.b16 %v861
        %v875 = vunpack.c.h.b16 %v861
        %v876 = vunpack.c.l.b16 %v862
        %v877 = vunpack.c.l.b16 %v863
        %v878 = vunpack.c.h.b16 %v863
        %v879 = vunpack.c.l.b16 %v864
        %v880 = vpack.c.b16 %v877, %v874
        %v881 = vpack.c.b16 %v878, %v875
        %v882 = vpack.c.b16 %v879, %v876
        %vm886 = vcmask 130048
        %v888 = vsel %vm886, %v869, 0
        %890 = vmatpush.bf16.msra.mxu0 0
        %891 = vmatpush.bf16.msra.mxu0 0
        %892 = vmatpush.bf16.msra.mxu0 0
        %893 = vmatpush.bf16.msra.mxu0 0
        %894 = vmatpush.bf16.msra.mxu0 0
        %895 = vmatpush.bf16.msra.mxu0 0
        %896 = vmatpush.bf16.msra.mxu0 0
        %897 = vmatpush.bf16.msra.mxu0 %v880
        %898 = vmatmul.bf16.gmra.mxu0 %v888
        %v899 = vpop.f32.mrf.mxu0
        %v900 = vadd.f32 0.0, %v899
        %v901 = vpop.f32.mrf.mxu0
        %v902 = vadd.f32 0.0, %v901
        %903 = vdwg.mxu0
        %904 = vmatpush.bf16.msra.mxu0 0
        %905 = vmatpush.bf16.msra.mxu0 0
        %906 = vmatpush.bf16.msra.mxu0 0
        %907 = vmatpush.bf16.msra.mxu0 0
        %908 = vmatpush.bf16.msra.mxu0 0
        %909 = vmatpush.bf16.msra.mxu0 0
        %910 = vmatpush.bf16.msra.mxu0 0
        %911 = vmatpush.bf16.msra.mxu0 %v881
        %912 = vmatmul.bf16.gmra.mxu0 %v888
        %v913 = vpop.f32.mrf.mxu0
        %v914 = vadd.f32 0.0, %v913
        %v915 = vpop.f32.mrf.mxu0
        %v916 = vadd.f32 0.0, %v915
        %917 = vdwg.mxu0
        %918 = vmatpush.bf16.msra.mxu0 0
        %919 = vmatpush.bf16.msra.mxu0 0
        %920 = vmatpush.bf16.msra.mxu0 0
        %921 = vmatpush.bf16.msra.mxu0 0
        %922 = vmatpush.bf16.msra.mxu0 0
        %923 = vmatpush.bf16.msra.mxu0 0
        %924 = vmatpush.bf16.msra.mxu0 0
        %925 = vmatpush.bf16.msra.mxu0 %v882
        %926 = vmatmul.bf16.gmra.mxu0 %v888
        %v927 = vpop.f32.mrf.mxu0
        %v928 = vadd.f32 0.0, %v927
        %v929 = vpop.f32.mrf.mxu0
        %v930 = vadd.f32 0.0, %v929
        %931 = vdwg.mxu0
        %v932 = vadd.f32 %v849, %v900
        %v933 = vadd.f32 %v850, %v914
        %v934 = vadd.f32 %v851, %v928
        %v935 = vadd.f32 %v852, %v902
        %v936 = vadd.f32 %v853, %v916
        %v937 = vadd.f32 %v854, %v930
        %s938 = sadd.s32 %s855, 2
        %s939 = smul.addr %s938, 4
        %s940 = scalar_lea.vmem [#allocation6], %s939
        %v941 = vld [vmem:[%s940] sm:$0xf]
        %v942 = vld [vmem:[%s940 + $0x4] sm:$0xf]
        %v943 = vld [vmem:[#allocation4 + $0xc] sm:$0xff]
        %v944 = vld [vmem:[#allocation4 + $0x14] sm:$0xf]
        %v945 = vld [vmem:[#allocation4 + $0x24] sm:$0xff]
        %v946 = vld [vmem:[#allocation4 + $0x2c] sm:$0xf]
        %v949 = vunpack.c.l.b16 %v941
        %v950 = vunpack.c.l.b16 %v942
        %v951 = vpack.c.b16 %v950, %v949
        %v956 = vunpack.c.l.b16 %v943
        %v957 = vunpack.c.h.b16 %v943
        %v958 = vunpack.c.l.b16 %v944
        %v959 = vunpack.c.l.b16 %v945
        %v960 = vunpack.c.h.b16 %v945
        %v961 = vunpack.c.l.b16 %v946
        %v962 = vpack.c.b16 %v959, %v956
        %v963 = vpack.c.b16 %v960, %v957
        %v964 = vpack.c.b16 %v961, %v958
        %v969 = vsel %vm886, %v951, 0
        %971 = vmatpush.bf16.msra.mxu0 0
        %972 = vmatpush.bf16.msra.mxu0 0
        %973 = vmatpush.bf16.msra.mxu0 0
        %974 = vmatpush.bf16.msra.mxu0 0
        %975 = vmatpush.bf16.msra.mxu0 0
        %976 = vmatpush.bf16.msra.mxu0 0
        %977 = vmatpush.bf16.msra.mxu0 0
        %978 = vmatpush.bf16.msra.mxu0 %v962
        %979 = vmatmul.bf16.gmra.mxu0 %v969
        %v980 = vpop.f32.mrf.mxu0
        %v981 = vadd.f32 0.0, %v980
        %v982 = vpop.f32.mrf.mxu0
        %v983 = vadd.f32 0.0, %v982
        %984 = vdwg.mxu0
        %985 = vmatpush.bf16.msra.mxu0 0
        %986 = vmatpush.bf16.msra.mxu0 0
        %987 = vmatpush.bf16.msra.mxu0 0
        %988 = vmatpush.bf16.msra.mxu0 0
        %989 = vmatpush.bf16.msra.mxu0 0
        %990 = vmatpush.bf16.msra.mxu0 0
        %991 = vmatpush.bf16.msra.mxu0 0
        %992 = vmatpush.bf16.msra.mxu0 %v963
        %993 = vmatmul.bf16.gmra.mxu0 %v969
        %v994 = vpop.f32.mrf.mxu0
        %v995 = vadd.f32 0.0, %v994
        %v996 = vpop.f32.mrf.mxu0
        %v997 = vadd.f32 0.0, %v996
        %998 = vdwg.mxu0
        %999 = vmatpush.bf16.msra.mxu0 0
        %1000 = vmatpush.bf16.msra.mxu0 0
        %1001 = vmatpush.bf16.msra.mxu0 0
        %1002 = vmatpush.bf16.msra.mxu0 0
        %1003 = vmatpush.bf16.msra.mxu0 0
        %1004 = vmatpush.bf16.msra.mxu0 0
        %1005 = vmatpush.bf16.msra.mxu0 0
        %1006 = vmatpush.bf16.msra.mxu0 %v964
        %1007 = vmatmul.bf16.gmra.mxu0 %v969
        %v1008 = vpop.f32.mrf.mxu0
        %v1009 = vadd.f32 0.0, %v1008
        %v1010 = vpop.f32.mrf.mxu0
        %v1011 = vadd.f32 0.0, %v1010
        %1012 = vdwg.mxu0
        %v1013 = vadd.f32 %v932, %v981
        %v1014 = vadd.f32 %v933, %v995
        %v1015 = vadd.f32 %v934, %v1009
        %v1016 = vadd.f32 %v935, %v983
        %v1017 = vadd.f32 %v936, %v997
        %v1018 = vadd.f32 %v937, %v1011
        %s1019 = scalar_lea.vmem [#allocation2], %s848
        %v1020 = vld [vmem:[%s1019] sm:$0xff]
        %v1021 = vld [vmem:[%s1019 + $0x8] sm:$0xff]
        %s1022 = smul.addr %s855, 4
        %s1023 = scalar_lea.vmem [#allocation3], %s1022
        %v1024 = vld [vmem:[%s1023] sm:$0xf]
        %v1025 = vld [vmem:[%s1023 + $0x4] sm:$0xf]
        %v1026 = vld [vmem:[%s361] sm:$0xff]
        %v1027 = vld [vmem:[%s361 + $0x8] sm:$0xf]
        %v1028 = vld [vmem:[%s361 + $0xc] sm:$0xff]
        %v1029 = vld [vmem:[%s361 + $0x14] sm:$0xf]
        %v1030 = vld [vmem:[%s361 + $0x18] sm:$0xff]
        %v1031 = vld [vmem:[%s361 + $0x20] sm:$0xf]
        %v1032 = vld [vmem:[%s361 + $0x24] sm:$0xff]
        %v1033 = vld [vmem:[%s361 + $0x2c] sm:$0xf]
        %v1034 = vld [vmem:[%s361 + $0x30] sm:$0xff]
        %v1035 = vld [vmem:[%s361 + $0x38] sm:$0xf]
        %v1036 = vld [vmem:[%s361 + $0x3c] sm:$0xff]
        %v1037 = vld [vmem:[%s361 + $0x44] sm:$0xf]
        %v1038 = vld [vmem:[%s361 + $0x48] sm:$0xff]
        %v1039 = vld [vmem:[%s361 + $0x50] sm:$0xf]
        %v1040 = vld [vmem:[%s361 + $0x54] sm:$0xff]
        %v1041 = vld [vmem:[%s361 + $0x5c] sm:$0xf]
        %v1042 = vld [vmem:[%s361 + $0x60] sm:$0xff]
        %v1043 = vld [vmem:[%s361 + $0x68] sm:$0xf]
        %v1044 = vld [vmem:[%s361 + $0x6c] sm:$0xff]
        %v1045 = vld [vmem:[%s361 + $0x74] sm:$0xf]
        %v1046 = vld [vmem:[%s361 + $0x78] sm:$0xff]
        %v1047 = vld [vmem:[%s361 + $0x80] sm:$0xf]
        %v1048 = vld [vmem:[%s361 + $0x84] sm:$0xff]
        %v1049 = vld [vmem:[%s361 + $0x8c] sm:$0xf]
        %v1050 = vld [vmem:[%s361 + $0x90] sm:$0xff]
        %v1051 = vld [vmem:[%s361 + $0x98] sm:$0xf]
        %v1052 = vld [vmem:[%s361 + $0x9c] sm:$0xff]
        %v1053 = vld [vmem:[%s361 + $0xa4] sm:$0xf]
        %v1054 = vld [vmem:[%s361 + $0xa8] sm:$0xff]
        %v1055 = vld [vmem:[%s361 + $0xb0] sm:$0xf]
        %v1056 = vld [vmem:[%s361 + $0xb4] sm:$0xff]
        %v1057 = vld [vmem:[%s361 + $0xbc] sm:$0xf]
        %v1058 = vld [vmem:[%s371] sm:$0x7]
        %v1060 = vperm.slane %v1058, 0
        %v1061 = vperm.slane %v1058, 1
        %v1062 = vperm.slane %v1058, 2
        %v1068 = vunpack.c.l.b16 %v1024
        %v1069 = vunpack.c.l.b16 %v1025
        %v1070 = vpack.c.b16 %v1069, %v1068
        %v1104 = vunpack.c.l.b16 %v1026
        %v1105 = vunpack.c.h.b16 %v1026
        %v1106 = vunpack.c.l.b16 %v1027
        %v1107 = vunpack.c.l.b16 %v1028
        %v1108 = vunpack.c.h.b16 %v1028
        %v1109 = vunpack.c.l.b16 %v1029
        %v1110 = vunpack.c.l.b16 %v1030
        %v1111 = vunpack.c.h.b16 %v1030
        %v1112 = vunpack.c.l.b16 %v1031
        %v1113 = vunpack.c.l.b16 %v1032
        %v1114 = vunpack.c.h.b16 %v1032
        %v1115 = vunpack.c.l.b16 %v1033
        %v1116 = vunpack.c.l.b16 %v1034
        %v1117 = vunpack.c.h.b16 %v1034
        %v1118 = vunpack.c.l.b16 %v1035
        %v1119 = vunpack.c.l.b16 %v1036
        %v1120 = vunpack.c.h.b16 %v1036
        %v1121 = vunpack.c.l.b16 %v1037
        %v1122 = vunpack.c.l.b16 %v1038
        %v1123 = vunpack.c.h.b16 %v1038
        %v1124 = vunpack.c.l.b16 %v1039
        %v1125 = vunpack.c.l.b16 %v1040
        %v1126 = vunpack.c.h.b16 %v1040
        %v1127 = vunpack.c.l.b16 %v1041
        %v1128 = vunpack.c.l.b16 %v1042
        %v1129 = vunpack.c.h.b16 %v1042
        %v1130 = vunpack.c.l.b16 %v1043
        %v1131 = vunpack.c.l.b16 %v1044
        %v1132 = vunpack.c.h.b16 %v1044
        %v1133 = vunpack.c.l.b16 %v1045
        %v1134 = vunpack.c.l.b16 %v1046
        %v1135 = vunpack.c.h.b16 %v1046
        %v1136 = vunpack.c.l.b16 %v1047
        %v1137 = vunpack.c.l.b16 %v1048
        %v1138 = vunpack.c.h.b16 %v1048
        %v1139 = vunpack.c.l.b16 %v1049
        %v1140 = vunpack.c.l.b16 %v1050
        %v1141 = vunpack.c.h.b16 %v1050
        %v1142 = vunpack.c.l.b16 %v1051
        %v1143 = vunpack.c.l.b16 %v1052
        %v1144 = vunpack.c.h.b16 %v1052
        %v1145 = vunpack.c.l.b16 %v1053
        %v1146 = vunpack.c.l.b16 %v1054
        %v1147 = vunpack.c.h.b16 %v1054
        %v1148 = vunpack.c.l.b16 %v1055
        %v1149 = vunpack.c.l.b16 %v1056
        %v1150 = vunpack.c.h.b16 %v1056
        %v1151 = vunpack.c.l.b16 %v1057
        %v1152 = vpack.c.b16 %v1107, %v1104
        %v1153 = vpack.c.b16 %v1108, %v1105
        %v1154 = vpack.c.b16 %v1109, %v1106
        %v1155 = vpack.c.b16 %v1113, %v1110
        %v1156 = vpack.c.b16 %v1114, %v1111
        %v1157 = vpack.c.b16 %v1115, %v1112
        %v1158 = vpack.c.b16 %v1119, %v1116
        %v1159 = vpack.c.b16 %v1120, %v1117
        %v1160 = vpack.c.b16 %v1121, %v1118
        %v1161 = vpack.c.b16 %v1125, %v1122
        %v1162 = vpack.c.b16 %v1126, %v1123
        %v1163 = vpack.c.b16 %v1127, %v1124
        %v1164 = vpack.c.b16 %v1131, %v1128
        %v1165 = vpack.c.b16 %v1132, %v1129
        %v1166 = vpack.c.b16 %v1133, %v1130
        %v1167 = vpack.c.b16 %v1137, %v1134
        %v1168 = vpack.c.b16 %v1138, %v1135
        %v1169 = vpack.c.b16 %v1139, %v1136
        %v1170 = vpack.c.b16 %v1143, %v1140
        %v1171 = vpack.c.b16 %v1144, %v1141
        %v1172 = vpack.c.b16 %v1145, %v1142
        %v1173 = vpack.c.b16 %v1149, %v1146
        %v1174 = vpack.c.b16 %v1150, %v1147
        %v1175 = vpack.c.b16 %v1151, %v1148
        %1200 = vmatpush.bf16.msra.mxu0 %v1173
        %1201 = vmatpush.bf16.msra.mxu0 %v1170
        %1202 = vmatpush.bf16.msra.mxu0 %v1167
        %1203 = vmatpush.bf16.msra.mxu0 %v1164
        %1204 = vmatpush.bf16.msra.mxu0 %v1161
        %1205 = vmatpush.bf16.msra.mxu0 %v1158
        %1206 = vmatpush.bf16.msra.mxu0 %v1155
        %1207 = vmatpush.bf16.msra.mxu0 %v1152
        %1208 = vmatmul.bf16.gmra.mxu0 %v1070
        %v1209 = vpop.f32.mrf.mxu0
        %v1210 = vadd.f32 %v1060, %v1209
        %v1211 = vpop.f32.mrf.mxu0
        %v1212 = vadd.f32 %v1060, %v1211
        %1213 = vdwg.mxu0
        %1214 = vmatpush.bf16.msra.mxu0 %v1174
        %1215 = vmatpush.bf16.msra.mxu0 %v1171
        %1216 = vmatpush.bf16.msra.mxu0 %v1168
        %1217 = vmatpush.bf16.msra.mxu0 %v1165
        %1218 = vmatpush.bf16.msra.mxu0 %v1162
        %1219 = vmatpush.bf16.msra.mxu0 %v1159
        %1220 = vmatpush.bf16.msra.mxu0 %v1156
        %1221 = vmatpush.bf16.msra.mxu0 %v1153
        %1222 = vmatmul.bf16.gmra.mxu0 %v1070
        %v1223 = vpop.f32.mrf.mxu0
        %v1224 = vadd.f32 %v1061, %v1223
        %v1225 = vpop.f32.mrf.mxu0
        %v1226 = vadd.f32 %v1061, %v1225
        %1227 = vdwg.mxu0
        %1228 = vmatpush.bf16.msra.mxu0 %v1175
        %1229 = vmatpush.bf16.msra.mxu0 %v1172
        %1230 = vmatpush.bf16.msra.mxu0 %v1169
        %1231 = vmatpush.bf16.msra.mxu0 %v1166
        %1232 = vmatpush.bf16.msra.mxu0 %v1163
        %1233 = vmatpush.bf16.msra.mxu0 %v1160
        %1234 = vmatpush.bf16.msra.mxu0 %v1157
        %1235 = vmatpush.bf16.msra.mxu0 %v1154
        %1236 = vmatmul.bf16.gmra.mxu0 %v1070
        %v1237 = vpop.f32.mrf.mxu0
        %v1238 = vadd.f32 %v1062, %v1237
        %v1239 = vpop.f32.mrf.mxu0
        %v1240 = vadd.f32 %v1062, %v1239
        %1241 = vdwg.mxu0
        %v1242 = vadd.f32 %v1013, %v1210
        %v1243 = vadd.f32 %v1016, %v1212
        %v1244 = vxor.u32 %v1242, 2147483648
        %v1245 = vxor.u32 %v1243, 2147483648
        %v1246 = vmul.f32 %v1244, 1.442695
        %v1247 = vpow.pop %v1246
        %v1248 = vmul.f32 %v1245, 1.442695
        %v1249 = vpow.pop %v1248
        %v1250 = vadd.f32 %v1247, 1.0
        %v1251 = vadd.f32 %v1249, 1.0
        %v1252 = vrcp.pop %v1250
        %v1253 = vmul.f32 %v1250, %v1252
        %v1254 = vsub.f32 1.0, %v1253
        %v1255 = vmul.f32 %v1252, %v1254
        %v1256 = vadd.f32 %v1252, %v1255
        %vm1257 = vweird.f32 %v1250
        %vm1258 = vweird.f32 %v1252
        %vm1259 = vmor %vm1257, %vm1258
        %v1260 = vsel %vm1259, %v1252, %v1256
        %v1261 = vand.u32 2147483647, %v1250
        %vm1262 = vcmp.eq.f32.partialorder %v1261, 8.507059e+37
        %v1263 = vand.u32 %v1250, 2147483648
        %v1264 = vor.u32 1.1754944e-38, %v1263
        %v1265 = vsel %vm1262, %v1264, %v1260
        %v1266 = vmul.f32 1.0, %v1265
        %v1267 = vrcp.pop %v1251
        %v1268 = vmul.f32 %v1251, %v1267
        %v1269 = vsub.f32 1.0, %v1268
        %v1270 = vmul.f32 %v1267, %v1269
        %v1271 = vadd.f32 %v1267, %v1270
        %vm1272 = vweird.f32 %v1251
        %vm1273 = vweird.f32 %v1267
        %vm1274 = vmor %vm1272, %vm1273
        %v1275 = vsel %vm1274, %v1267, %v1271
        %v1276 = vand.u32 2147483647, %v1251
        %vm1277 = vcmp.eq.f32.partialorder %v1276, 8.507059e+37
        %v1278 = vand.u32 %v1251, 2147483648
        %v1279 = vor.u32 1.1754944e-38, %v1278
        %v1280 = vsel %vm1277, %v1279, %v1275
        %v1281 = vmul.f32 1.0, %v1280
        %v1282 = vadd.f32 %v1014, %v1224
        %v1283 = vadd.f32 %v1017, %v1226
        %v1284 = vxor.u32 %v1282, 2147483648
        %v1285 = vxor.u32 %v1283, 2147483648
        %v1286 = vmul.f32 %v1284, 1.442695
        %v1287 = vpow.pop %v1286
        %v1288 = vmul.f32 %v1285, 1.442695
        %v1289 = vpow.pop %v1288
        %v1290 = vadd.f32 %v1287, 1.0
        %v1291 = vadd.f32 %v1289, 1.0
        %v1292 = vrcp.pop %v1290
        %v1293 = vmul.f32 %v1290, %v1292
        %v1294 = vsub.f32 1.0, %v1293
        %v1295 = vmul.f32 %v1292, %v1294
        %v1296 = vadd.f32 %v1292, %v1295
        %vm1297 = vweird.f32 %v1290
        %vm1298 = vweird.f32 %v1292
        %vm1299 = vmor %vm1297, %vm1298
        %v1300 = vsel %vm1299, %v1292, %v1296
        %v1301 = vand.u32 2147483647, %v1290
        %vm1302 = vcmp.eq.f32.partialorder %v1301, 8.507059e+37
        %v1303 = vand.u32 %v1290, 2147483648
        %v1304 = vor.u32 1.1754944e-38, %v1303
        %v1305 = vsel %vm1302, %v1304, %v1300
        %v1306 = vmul.f32 1.0, %v1305
        %v1307 = vrcp.pop %v1291
        %v1308 = vmul.f32 %v1291, %v1307
        %v1309 = vsub.f32 1.0, %v1308
        %v1310 = vmul.f32 %v1307, %v1309
        %v1311 = vadd.f32 %v1307, %v1310
        %vm1312 = vweird.f32 %v1291
        %vm1313 = vweird.f32 %v1307
        %vm1314 = vmor %vm1312, %vm1313
        %v1315 = vsel %vm1314, %v1307, %v1311
        %v1316 = vand.u32 2147483647, %v1291
        %vm1317 = vcmp.eq.f32.partialorder %v1316, 8.507059e+37
        %v1318 = vand.u32 %v1291, 2147483648
        %v1319 = vor.u32 1.1754944e-38, %v1318
        %v1320 = vsel %vm1317, %v1319, %v1315
        %v1321 = vmul.f32 1.0, %v1320
        %v1322 = vmul.f32 %v1266, %v1238
        %v1323 = vmul.f32 %v1281, %v1240
        %v1324 = vadd.f32 %v1015, %v1322
        %v1325 = vadd.f32 %v1018, %v1323
        %v1326 = vtanh.pop %v1324
        %v1327 = vtanh.pop %v1325
        %v1328 = vsub.f32 1.0, %v1306
        %v1329 = vsub.f32 1.0, %v1321
        %v1330 = vmul.f32 %v1328, %v1326
        %v1331 = vmul.f32 %v1329, %v1327
        %v1332 = vmul.f32 %v1306, %v1020
        %v1333 = vmul.f32 %v1321, %v1021
        %v1334 = vadd.f32 %v1330, %v1332
        %v1335 = vadd.f32 %v1331, %v1333
        %1336 = vst [vmem:[%s1019] sm:$0xff] %v1334
        %1337 = vst [vmem:[%s1019 + $0x8] sm:$0xff] %v1335
        %v1338 = vpack.c.bf16 %v1334, %v1334
        %v1339 = vpack.c.bf16 %v1335, %v1335
        %1340 = vst [vmem:[%s1023] sm:$0xf] %v1338
        %1341 = vst [vmem:[%s1023 + $0x4] sm:$0xf] %v1339
        %p1342 = scmp.eq.s32.totalorder %s32, 1
        %p1343 = scmp.eq.s32.totalorder %s33, 2
        %p1344 = pnand %p1342, %p1343
        %p1345 = pneg %p1344
        // Predicated region
        $region73: #{tpu_custom_call.1} parent=39 // pred_check
          _
        $region74: #{tpu_custom_call.1} parent=39 // pred_check_branch
          %1347 = sbr.rel (%p1344) target = $region76
        $region75: #{tpu_custom_call.1} parent=39 // pred_region
          %1348 = vst [vmem:[%s413] sm:$0xff] %v1334
          %1349 = vst [vmem:[%s413 + $0x8] sm:$0xff] %v1335
        $region76: #{tpu_custom_call.1} parent=39 // pred_fallthru
          _
        %s1350 = sand.u32 %s191, 1
        %s1351 = scalar_lea.sflag [#allocation8], %s1350
        %s1352 = sand.u32 %s191, 1
        %s1353 = smul.addr %s1352, 16
        %s1354 = scalar_lea.vmem [#allocation15], %s1353
        // Predicated region
        $region77: #{tpu_custom_call.1} parent=39 // pred_check
          %p1355 = pneg %p201
        $region78: #{tpu_custom_call.1} parent=39 // pred_check_branch
          %1357 = sbr.rel (%p1355) target = $region80
        $region79: #{tpu_custom_call.1} parent=39 // pred_region
          %p1358 = scmp.eq.s32.totalorder %s32, 1
          %p1359 = scmp.eq.s32.totalorder %s33, 2
          %p1360 = pnand %p1358, %p1359
          %p1361 = pneg %p1360
          %s1362 = scalar_select %p1361, %s34, 0
          %s1363 = smul.u32 2, %s1362
          %1365 = vsyncadd %s1351, 0
          %s1366 = smul.addr %s1363, 8
          %s1367 = scalar_lea.hbm %s6, %s1366
          %s1368 = sshll.u32 %s1354, 4
          %s1369 = int_to_ptr.vmem [resolvable:$true] %s1368
          %s1370 = sshll.u32 %s1367, 4
          %s1371 = int_to_ptr.hbm [resolvable:$true] %s1370
          %1376 = dma.vmem_to_hbm [thread:$0]  %s1369, 256, %s1371, %s1351, 128, 128, 8
        $region80: #{tpu_custom_call.1} parent=39 // pred_fallthru
          _
      $region40: #{tpu_custom_call.1} parent=5 // pred_fallthru
        _
      %p1377 = scmp.le.s32.totalorder 2, %s22
      // Predicated region
      $region81: #{tpu_custom_call.1} parent=5 // pred_check
        %p1378 = pneg %p1377
      $region82: #{tpu_custom_call.1} parent=5 // pred_check_branch
        %1380 = sbr.rel (%p1378) target = $region84
      $region83: #{tpu_custom_call.1} parent=5 // pred_region
        %s1381 = ssub.s32 %s22, 2
        // Predicated region
        $region85: #{tpu_custom_call.1} parent=83 // pred_check
          %p1382 = pneg %p207
        $region86: #{tpu_custom_call.1} parent=83 // pred_check_branch
          %1384 = sbr.rel (%p1382) target = $region88
        $region87: #{tpu_custom_call.1} parent=83 // pred_region
          %s1385 = sand.u32 %s192, 1
          %s1386 = scalar_lea.sflag [#allocation8], %s1385
          %s1387 = sand.u32 %s192, 1
          %s1388 = smul.addr %s1387, 16
          %s1389 = scalar_lea.vmem [#allocation15], %s1388
          %1391 = dma.done %s1386, 256
        $region88: #{tpu_custom_call.1} parent=83 // pred_fallthru
          _
      $region84: #{tpu_custom_call.1} parent=5 // pred_fallthru
        _
    $region6: #{tpu_custom_call.1} parent=1 // loop_footer
      %s26 = sadd.s32 1, %s22
    $region7: #{tpu_custom_call.1} parent=1 // loop_footer_branch
      %21 = sbr.rel target = $region3
    $region8: #{tpu_custom_call.1} parent=1 // loop_exit
      _
    %1392 = vsyncpa [#allocation7], 1
    %s1393 = scalar_lea.sflag [#allocation7], 1
    %1394 = vsyncpa %s1393, 1
    %1395 = vsyncpa [#allocation10], 1
    %s1396 = scalar_lea.sflag [#allocation10], 1
    %1397 = vsyncpa %s1396, 1
    %1398 = vsyncpa [#allocation13], 1
    %s1399 = scalar_lea.sflag [#allocation13], 1
    %1400 = vsyncpa %s1399, 1
    %1401 = vsyncpa [#allocation8], 1
    %s1402 = scalar_lea.sflag [#allocation8], 1
    %1403 = vsyncpa %s1402, 1
  %1404 = vsyncmov [#allocation5]
  %s1405 = vpop.sfrf %1404
  %p1406 = scmp.eq.s32.totalorder %s1405, 0
  %p1407 = pneg %p1406
  %1409 = shalt.err (%p1407)

</llo_original>
